<compile_context>
chip_gen: v6e
topology: v6e:2x2x1
jax: 0.10.0
libtpu: 0.0.40
codegen_flags: <defaults>
</compile_context>

<pallas_src>
import functools
import math

import jax
import jax.numpy as jnp
from jax.experimental import pallas as pl
from jax.experimental.pallas import tpu as pltpu

NEG_INF = -1e9
LN_EPS = 1e-5


def _gelu(v):
    # tanh-approximation GELU (EUP-friendly, no erf)
    return 0.5 * v * (1.0 + jnp.tanh(0.7978845608028654 * (v + 0.044715 * v * v * v)))


def _layernorm(v, g, b):
    mu = jnp.mean(v, axis=-1, keepdims=True)
    var = jnp.mean((v - mu) * (v - mu), axis=-1, keepdims=True)
    return (v - mu) * jax.lax.rsqrt(var + LN_EPS) * g + b


def encoder_kernel(x_ref, mask_ref,
                   wqkv_ref, bqkv_ref, wo_ref, bo_ref,
                   ln1_g_ref, ln1_b_ref,
                   w1_ref, b1_ref, w2_ref, b2_ref,
                   ln2_g_ref, ln2_b_ref,
                   out_ref, *, num_heads, ffn_chunks):
    TB, S, H = x_ref.shape
    hd = H // num_heads
    scale = 1.0 / math.sqrt(hd)
    M = TB * S

    x_bf = x_ref[...].reshape(M, H)                    # (M, H) bf16 activation tile
    x = x_bf.astype(jnp.float32)                       # f32 residual stream

    # ---- fused QKV: one (M,H) x (H,3H) bf16 MXU pass -----------------------
    qkv = jnp.dot(x_bf, wqkv_ref[...],
                  preferred_element_type=jnp.float32) + bqkv_ref[...]
    qkv_b = qkv.astype(jnp.bfloat16)                   # (M, 3H)

    # Additive key mask: broadcast ONCE (JAX does not CSE broadcast_in_dim).
    mask_add = jnp.broadcast_to(mask_ref[...], (TB, S, S))   # (TB, S, S) f32

    # ---- multi-head attention with wo folded per head ----------------------
    # wo arrives pre-split as (NH, hd, H): wo_ref[h] is a clean leading-dim
    # load, and the per-head (M,hd)x(hd,H) contractions accumulate directly
    # into the (M,H) residual-space buffer -> no NH-way concat / relayout.
    # TODO(synk): with head_dim >= 128 the q/k/v head slices below become
    # lane-aligned (free); hd < 128 still pays one lane shift per slice.
    attn = jnp.zeros((M, H), jnp.float32)
    for h in range(num_heads):                         # static unroll, NH small
        lo = h * hd
        q = qkv_b[:, lo:lo + hd].reshape(TB, S, hd)
        k = qkv_b[:, H + lo:H + lo + hd].reshape(TB, S, hd)
        v = qkv_b[:, 2 * H + lo:2 * H + lo + hd].reshape(TB, S, hd)
        s = jnp.einsum('bqd,bkd->bqk', q, k,
                       preferred_element_type=jnp.float32)
        s = s * scale + mask_add
        s = s - jnp.max(s, axis=-1, keepdims=True)
        p = jnp.exp(s)
        p = p * pl.reciprocal(jnp.sum(p, axis=-1, keepdims=True), approx=True)
        ctx = jnp.einsum('bqk,bkd->bqd', p.astype(jnp.bfloat16), v,
                         preferred_element_type=jnp.float32)
        attn = attn + jnp.dot(ctx.reshape(M, hd).astype(jnp.bfloat16),
                              wo_ref[h], preferred_element_type=jnp.float32)

    h1 = _layernorm(x + attn + bo_ref[...], ln1_g_ref[...], ln1_b_ref[...])
    h1_b = h1.astype(jnp.bfloat16)

    # ---- feed forward (optionally chunked over F to bound the (M,F) slab) --
    F = w1_ref.shape[1]
    if ffn_chunks == 1:
        ff = jnp.dot(h1_b, w1_ref[...],
                     preferred_element_type=jnp.float32) + b1_ref[...]
        ff = _gelu(ff)
        ff = jnp.dot(ff.astype(jnp.bfloat16), w2_ref[...],
                     preferred_element_type=jnp.float32)
    else:
        fc = F // ffn_chunks

        def body(c, acc):
            off = pl.multiple_of(c * fc, fc)
            f = jnp.dot(h1_b, w1_ref[:, pl.ds(off, fc)],
                        preferred_element_type=jnp.float32) + b1_ref[:, pl.ds(off, fc)]
            f = _gelu(f).astype(jnp.bfloat16)
            return acc + jnp.dot(f, w2_ref[pl.ds(off, fc), :],
                                 preferred_element_type=jnp.float32)

        ff = jax.lax.fori_loop(0, ffn_chunks, body,
                               jnp.zeros((M, H), jnp.float32))

    out = _layernorm(h1 + ff + b2_ref[...], ln2_g_ref[...], ln2_b_ref[...])
    out_ref[...] = out.reshape(TB, S, H).astype(out_ref.dtype)


def init_params(key, vocab_size, max_seq, hidden, ffn):
    ks = jax.random.split(key, 8)
    bf = lambda k, shape: (0.02 * jax.random.normal(k, shape)).astype(jnp.bfloat16)
    f32 = jnp.float32
    return dict(
        tok_emb=bf(ks[0], (vocab_size, hidden)),
        pos_emb=bf(ks[1], (max_seq, hidden)),
        wq=bf(ks[2], (hidden, hidden)), bq=jnp.zeros((1, hidden), f32),
        wk=bf(ks[3], (hidden, hidden)), bk=jnp.zeros((1, hidden), f32),
        wv=bf(ks[4], (hidden, hidden)), bv=jnp.zeros((1, hidden), f32),
        wo=bf(ks[5], (hidden, hidden)), bo=jnp.zeros((1, hidden), f32),
        ln1_g=jnp.ones((1, hidden), f32), ln1_b=jnp.zeros((1, hidden), f32),
        w1=bf(ks[6], (hidden, ffn)), b1=jnp.zeros((1, ffn), f32),
        w2=bf(ks[7], (ffn, hidden)), b2=jnp.zeros((1, hidden), f32),
        ln2_g=jnp.ones((1, hidden), f32), ln2_b=jnp.zeros((1, hidden), f32),
    )


def _vmem_capacity_bytes():
    try:
        return int(getattr(pltpu.get_tpu_info(), "vmem_capacity_bytes", 64 << 20))
    except Exception:
        return 64 << 20          # conservative (v7x per-TC) fallback


def _select_tiling(batch, seq, hidden, ffn, weight_bytes, vmem_cap):
    """Pick (TB, ffn_chunks, vmem_limit_bytes) from the real VMEM capacity.

    v7x-like (<=64 MiB / TC, 2 TCs): modest budget, require >=2 grid steps
    (preferably an even count) so both TensorCores get work, chunk the FFN.
    v5e/v6e (128 MiB, single TC): grow TB toward the big budget to amortize
    per-grid-step overhead and fill the MXU M dimension.
    """
    headroom = 16 << 20                       # compiler scratch + slack
    budget = max(vmem_cap - headroom, 8 << 20)
    small_vmem = vmem_cap <= (64 << 20)
    min_steps = 2 if (small_vmem and batch >= 2) else 1

    def ffn_chunk(tb):
        # Largest F-chunk (kept a 128-lane multiple) whose f32+bf16
        # intermediate stays around <= 8 MiB; otherwise the full F.
        target = (8 << 20) // max(1, tb * seq * 6)
        fc = ffn
        while fc > target and fc % 2 == 0 and (fc // 2) % 128 == 0:
            fc //= 2
        return fc

    def step_bytes(tb, fc):
        m = tb * seq
        io = 2 * (2 * m * hidden * 2 + tb * seq * 4)       # dbl-buffered bf16 x/out + mask
        act = (m * hidden * 4                              # f32 residual
               + m * 3 * hidden * 6                        # qkv f32 + bf16
               + 3 * tb * seq * seq * 4                    # mask_add + live scores/probs
               + 3 * m * hidden * 4                        # attn acc, h1, ffn acc
               + m * fc * 6)                               # FFN chunk f32 + bf16
        return io + act

    candidates = [tb for tb in range(1, batch + 1)
                  if batch % tb == 0 and batch // tb >= min_steps
                  and weight_bytes + step_bytes(tb, ffn_chunk(tb)) <= budget]
    if not candidates:
        candidates = [1]
    if small_vmem:
        even = [tb for tb in candidates if (batch // tb) % 2 == 0]
        if even:
            candidates = even
    tb = max(candidates)
    fc = ffn_chunk(tb)
    n_chunks = max(1, ffn // fc)

    vmem_limit = int(min(vmem_cap - (8 << 20),
                         max(32 << 20,
                             weight_bytes + step_bytes(tb, fc) + (8 << 20))))
    return tb, n_chunks, vmem_limit


def encoder_forward(input_ids, attention_mask, params, *, num_heads):
    B, S = input_ids.shape
    H = params["tok_emb"].shape[1]
    F = params["w1"].shape[1]
    assert H % num_heads == 0
    hd = H // num_heads

    # Embedding lookup stays bf16 end-to-end so the (B,S,H) activation XLA
    # materializes for the kernel is half the size of an f32 round trip.
    # TODO(synk): CompilerParams(allow_input_fusion) could fuse the gather+add
    # into the pallas_call operand and skip this HBM round trip entirely.
    x = params["tok_emb"][input_ids] + params["pos_emb"][None, :S, :]      # bf16 (B,S,H)
    mask_add = ((1.0 - attention_mask.astype(jnp.float32)) * NEG_INF)[:, None, :]

    # Weight prep (tiny XLA glue, weights only):
    #   * fused QKV weight (H, 3H) -> one MXU pass with N=3H
    #   * wo pre-split per head (NH, hd, H) -> clean leading-dim loads in-kernel
    wqkv = jnp.concatenate([params["wq"], params["wk"], params["wv"]], axis=1)
    bqkv = jnp.concatenate([params["bq"], params["bk"], params["bv"]], axis=1)
    wo_h = params["wo"].reshape(num_heads, hd, H)

    weight_args = (wqkv, bqkv, wo_h, params["bo"],
                   params["ln1_g"], params["ln1_b"],
                   params["w1"], params["b1"], params["w2"], params["b2"],
                   params["ln2_g"], params["ln2_b"])
    weight_bytes = sum(int(a.size) * a.dtype.itemsize for a in weight_args)

    vmem_cap = _vmem_capacity_bytes()
    TB, ffn_chunks, vmem_limit = _select_tiling(B, S, H, F, weight_bytes, vmem_cap)
    grid = (B // TB,)

    # Grid-invariant weights: untiled, resident in VMEM (single copy, no
    # per-step double buffering of the dominant VMEM user).
    weight_specs = [pl.BlockSpec(memory_space=pltpu.MemorySpace.VMEM)
                    for _ in weight_args]

    out = pl.pallas_call(
        functools.partial(encoder_kernel, num_heads=num_heads,
                          ffn_chunks=ffn_chunks),
        out_shape=jax.ShapeDtypeStruct((B, S, H), jnp.bfloat16),
        grid=grid,
        in_specs=[
            pl.BlockSpec((TB, S, H), lambda b: (b, 0, 0)),   # x (bf16)
            pl.BlockSpec((TB, 1, S), lambda b: (b, 0, 0)),   # additive mask (f32)
        ] + weight_specs,
        out_specs=pl.BlockSpec((TB, S, H), lambda b: (b, 0, 0)),
        compiler_params=pltpu.CompilerParams(
            dimension_semantics=("parallel",),
            vmem_limit_bytes=vmem_limit),
    )(x, mask_add, *weight_args)
    return out


def back_translation_forward(features, params, *, num_heads=4):
    """Mirrors BackTranslation.forward: returns the updated features dict."""
    token_embeddings = encoder_forward(
        features["input_ids"], features["attention_mask"], params,
        num_heads=num_heads)
    features.update({
        "token_embeddings": token_embeddings,
        "cls_token_embeddings": token_embeddings[:, 0, :],   # cls = tokens[:, 0, :]
        "attention_mask": features["attention_mask"],
    })
    # TODO(synk): pretrained MarianMT weights / tokenizer / autoregressive
    # generate() (the back_translate path) have no Pallas equivalent here.
    return features


def encoder_reference(input_ids, attention_mask, params, *, num_heads):
    """Pure-JAX reference with identical bf16/f32 mixed precision."""
    B, S = input_ids.shape
    H = params["tok_emb"].shape[1]
    hd = H // num_heads
    xb = params["tok_emb"][input_ids] + params["pos_emb"][None, :S, :]   # bf16
    x = xb.astype(jnp.float32)
    q = jnp.einsum('bsh,hk->bsk', xb, params["wq"], preferred_element_type=jnp.float32) + params["bq"]
    k = jnp.einsum('bsh,hk->bsk', xb, params["wk"], preferred_element_type=jnp.float32) + params["bk"]
    v = jnp.einsum('bsh,hk->bsk', xb, params["wv"], preferred_element_type=jnp.float32) + params["bv"]
    q = q.reshape(B, S, num_heads, hd).astype(jnp.bfloat16)
    k = k.reshape(B, S, num_heads, hd).astype(jnp.bfloat16)
    v = v.reshape(B, S, num_heads, hd).astype(jnp.bfloat16)
    add_mask = (1.0 - attention_mask.astype(jnp.float32))[:, None, None, :] * NEG_INF
    s = jnp.einsum('bqhd,bkhd->bhqk', q, k, preferred_element_type=jnp.float32)
    s = s * (1.0 / math.sqrt(hd)) + add_mask
    s = s - jnp.max(s, axis=-1, keepdims=True)
    p = jnp.exp(s)
    p = p / jnp.sum(p, axis=-1, keepdims=True)
    ctx = jnp.einsum('bhqk,bkhd->bqhd', p.astype(jnp.bfloat16), v,
                     preferred_element_type=jnp.float32).reshape(B, S, H)
    attn = jnp.einsum('bsh,hk->bsk', ctx.astype(jnp.bfloat16), params["wo"],
                      preferred_element_type=jnp.float32) + params["bo"]
    h1 = _layernorm(x + attn, params["ln1_g"], params["ln1_b"])
    ff = jnp.einsum('bsh,hf->bsf', h1.astype(jnp.bfloat16), params["w1"],
                    preferred_element_type=jnp.float32) + params["b1"]
    ff = _gelu(ff)
    ff = jnp.einsum('bsf,fh->bsh', ff.astype(jnp.bfloat16), params["w2"],
                    preferred_element_type=jnp.float32) + params["b2"]
    return _layernorm(h1 + ff, params["ln2_g"], params["ln2_b"])


if __name__ == "__main__":
    B, S, H, NH, F, V = 2, 8, 32, 4, 64, 100
    key = jax.random.PRNGKey(0)
    k_ids, k_params = jax.random.split(key)

    input_ids = jax.random.randint(k_ids, (B, S), 0, V, dtype=jnp.int32)
    attention_mask = jnp.ones((B, S), jnp.int32).at[1, S - 2:].set(0)  # ragged mask
    params = init_params(k_params, V, S, H, F)

    features = {"input_ids": input_ids, "attention_mask": attention_mask}
    out_features = back_translation_forward(dict(features), params, num_heads=NH)

    tok = jax.block_until_ready(out_features["token_embeddings"])
    cls = jax.block_until_ready(out_features["cls_token_embeddings"])
    assert tok.shape == (B, S, H)
    assert cls.shape == (B, H)

    ref = jax.block_until_ready(
        encoder_reference(input_ids, attention_mask, params, num_heads=NH))
    tok32 = tok.astype(jnp.float32)
    assert jnp.allclose(tok32, ref, atol=2e-2, rtol=2e-2), \
        float(jnp.max(jnp.abs(tok32 - ref)))
    assert jnp.allclose(cls.astype(jnp.float32), ref[:, 0, :], atol=2e-2, rtol=2e-2)
    print("KERNEL_OK")
</pallas_src>

<mosaic_0001>
module attributes {stable_mosaic.version = 11 : i64} {
  func.func @encoder_kernel(%arg0: i32, %arg1: memref<1x8x32xbf16, #tpu.memory_space<vmem>>, %arg2: memref<1x1x8xf32, #tpu.memory_space<vmem>>, %arg3: memref<32x96xbf16, #tpu.memory_space<vmem>>, %arg4: memref<1x96xf32, #tpu.memory_space<vmem>>, %arg5: memref<4x8x32xbf16, #tpu.memory_space<vmem>>, %arg6: memref<1x32xf32, #tpu.memory_space<vmem>>, %arg7: memref<1x32xf32, #tpu.memory_space<vmem>>, %arg8: memref<1x32xf32, #tpu.memory_space<vmem>>, %arg9: memref<32x64xbf16, #tpu.memory_space<vmem>>, %arg10: memref<1x64xf32, #tpu.memory_space<vmem>>, %arg11: memref<64x32xbf16, #tpu.memory_space<vmem>>, %arg12: memref<1x32xf32, #tpu.memory_space<vmem>>, %arg13: memref<1x32xf32, #tpu.memory_space<vmem>>, %arg14: memref<1x32xf32, #tpu.memory_space<vmem>>, %arg15: memref<1x8x32xbf16, #tpu.memory_space<vmem>>) attributes {dimension_semantics = [#tpu.dimension_semantics<parallel>], iteration_bounds = array<i64: 2>, scalar_prefetch = 0 : i64, scratch_operands = 0 : i64, tpu.core_type = #tpu.core_type<tc>, window_params = [{transform_indices = @transform_0, window_bounds = array<i64: 1, 8, 32>}, {transform_indices = @transform_1, window_bounds = array<i64: 1, 1, 8>}, {pipeline_mode = #tpu.pipeline_mode<synchronous>, transform_indices = @transform_2, window_bounds = array<i64: 32, 96>}, {pipeline_mode = #tpu.pipeline_mode<synchronous>, transform_indices = @transform_3, window_bounds = array<i64: 1, 96>}, {pipeline_mode = #tpu.pipeline_mode<synchronous>, transform_indices = @transform_4, window_bounds = array<i64: 4, 8, 32>}, {pipeline_mode = #tpu.pipeline_mode<synchronous>, transform_indices = @transform_5, window_bounds = array<i64: 1, 32>}, {pipeline_mode = #tpu.pipeline_mode<synchronous>, transform_indices = @transform_6, window_bounds = array<i64: 1, 32>}, {pipeline_mode = #tpu.pipeline_mode<synchronous>, transform_indices = @transform_7, window_bounds = array<i64: 1, 32>}, {pipeline_mode = #tpu.pipeline_mode<synchronous>, transform_indices = @transform_8, window_bounds = array<i64: 32, 64>}, {pipeline_mode = #tpu.pipeline_mode<synchronous>, transform_indices = @transform_9, window_bounds = array<i64: 1, 64>}, {pipeline_mode = #tpu.pipeline_mode<synchronous>, transform_indices = @transform_10, window_bounds = array<i64: 64, 32>}, {pipeline_mode = #tpu.pipeline_mode<synchronous>, transform_indices = @transform_11, window_bounds = array<i64: 1, 32>}, {pipeline_mode = #tpu.pipeline_mode<synchronous>, transform_indices = @transform_12, window_bounds = array<i64: 1, 32>}, {pipeline_mode = #tpu.pipeline_mode<synchronous>, transform_indices = @transform_13, window_bounds = array<i64: 1, 32>}, {transform_indices = @transform_14, window_bounds = array<i64: 1, 8, 32>}]} {
    %c0 = arith.constant 0 : index
    %c0_0 = arith.constant 0 : index
    %c0_1 = arith.constant 0 : index
    %0 = vector.load %arg1[%c0, %c0_0, %c0_1] : memref<1x8x32xbf16, #tpu.memory_space<vmem>>, vector<1x8x32xbf16>
    %1 = vector.shape_cast %0 : vector<1x8x32xbf16> to vector<8x32xbf16>
    %2 = arith.extf %1 : vector<8x32xbf16> to vector<8x32xf32>
    %c0_2 = arith.constant 0 : index
    %c0_3 = arith.constant 0 : index
    %3 = vector.load %arg3[%c0_2, %c0_3] : memref<32x96xbf16, #tpu.memory_space<vmem>>, vector<32x96xbf16>
    %cst = arith.constant dense<0.000000e+00> : vector<8x96xf32>
    %4 = tpu.matmul %1, %3, %cst {dimension_numbers = #tpu.dot_dimension_numbers<[1], [0], [0], [1], [0, 0, 1, 1], [], []>} : vector<8x32xbf16>, vector<32x96xbf16>, vector<8x96xf32> -> vector<8x96xf32>
    %c0_4 = arith.constant 0 : index
    %c0_5 = arith.constant 0 : index
    %5 = vector.load %arg4[%c0_4, %c0_5] : memref<1x96xf32, #tpu.memory_space<vmem>>, vector<1x96xf32>
    %6 = vector.broadcast %5 : vector<1x96xf32> to vector<8x96xf32>
    %7 = arith.addf %4, %6 : vector<8x96xf32>
    %8 = arith.truncf %7 : vector<8x96xf32> to vector<8x96xbf16>
    %c0_6 = arith.constant 0 : index
    %c0_7 = arith.constant 0 : index
    %c0_8 = arith.constant 0 : index
    %9 = vector.load %arg2[%c0_6, %c0_7, %c0_8] : memref<1x1x8xf32, #tpu.memory_space<vmem>>, vector<1x1x8xf32>
    %10 = vector.shape_cast %9 : vector<1x1x8xf32> to vector<1x1x8xf32>
    %11 = vector.broadcast %10 : vector<1x1x8xf32> to vector<1x8x8xf32>
    %cst_9 = arith.constant 0.000000e+00 : f32
    %12 = vector.broadcast %cst_9 : f32 to vector<8x32xf32>
    %13 = vector.extract_strided_slice %8 {offsets = [0, 0], sizes = [8, 8], strides = [1, 1]} : vector<8x96xbf16> to vector<8x8xbf16>
    %14 = vector.shape_cast %13 : vector<8x8xbf16> to vector<1x8x8xbf16>
    %15 = vector.extract_strided_slice %8 {offsets = [0, 32], sizes = [8, 8], strides = [1, 1]} : vector<8x96xbf16> to vector<8x8xbf16>
    %16 = vector.shape_cast %15 : vector<8x8xbf16> to vector<1x8x8xbf16>
    %17 = vector.extract_strided_slice %8 {offsets = [0, 64], sizes = [8, 8], strides = [1, 1]} : vector<8x96xbf16> to vector<8x8xbf16>
    %18 = vector.shape_cast %17 : vector<8x8xbf16> to vector<1x8x8xbf16>
    "tpu.trace_start"() <{level = 10 : i32, message = "bqd,bkd->bqk"}> : () -> ()
    %cst_10 = arith.constant dense<0.000000e+00> : vector<1x8x8xf32>
    %19 = tpu.matmul %14, %16, %cst_10 {dimension_numbers = #tpu.dot_dimension_numbers<[2], [2], [1], [1], [0, 0, 0, 1, 1, 1], [0], [0]>} : vector<1x8x8xbf16>, vector<1x8x8xbf16>, vector<1x8x8xf32> -> vector<1x8x8xf32>
    "tpu.trace_stop"() : () -> ()
    %cst_11 = arith.constant 0.353553385 : f32
    %20 = vector.broadcast %cst_11 : f32 to vector<1x8x8xf32>
    %21 = arith.mulf %19, %20 : vector<1x8x8xf32>
    %22 = arith.addf %21, %11 : vector<1x8x8xf32>
    %cst_12 = arith.constant dense<0xFF800000> : vector<1x8xf32>
    %23 = vector.multi_reduction <maximumf>, %22, %cst_12 [2] : vector<1x8x8xf32> to vector<1x8xf32>
    %24 = vector.shape_cast %23 : vector<1x8xf32> to vector<1x8x1xf32>
    %25 = vector.broadcast %24 : vector<1x8x1xf32> to vector<1x8x8xf32>
    %26 = arith.subf %22, %25 : vector<1x8x8xf32>
    %27 = math.exp %26 : vector<1x8x8xf32>
    %cst_13 = arith.constant dense<0.000000e+00> : vector<1x8xf32>
    %28 = vector.multi_reduction <add>, %27, %cst_13 [2] : vector<1x8x8xf32> to vector<1x8xf32>
    %29 = vector.shape_cast %28 : vector<1x8xf32> to vector<1x8x1xf32>
    %30 = tpu.reciprocal %29 {approx = true} : vector<1x8x1xf32> -> vector<1x8x1xf32>
    %31 = vector.broadcast %30 : vector<1x8x1xf32> to vector<1x8x8xf32>
    %32 = arith.mulf %27, %31 : vector<1x8x8xf32>
    %33 = arith.truncf %32 : vector<1x8x8xf32> to vector<1x8x8xbf16>
    "tpu.trace_start"() <{level = 10 : i32, message = "bqk,bkd->bqd"}> : () -> ()
    %cst_14 = arith.constant dense<0.000000e+00> : vector<1x8x8xf32>
    %34 = tpu.matmul %33, %18, %cst_14 {dimension_numbers = #tpu.dot_dimension_numbers<[2], [1], [1], [2], [0, 0, 0, 1, 1, 2], [0], [0]>} : vector<1x8x8xbf16>, vector<1x8x8xbf16>, vector<1x8x8xf32> -> vector<1x8x8xf32>
    "tpu.trace_stop"() : () -> ()
    %35 = vector.shape_cast %34 : vector<1x8x8xf32> to vector<8x8xf32>
    %36 = arith.truncf %35 : vector<8x8xf32> to vector<8x8xbf16>
    %c0_15 = arith.constant 0 : index
    %c0_16 = arith.constant 0 : index
    %c0_17 = arith.constant 0 : index
    %37 = vector.load %arg5[%c0_15, %c0_16, %c0_17] : memref<4x8x32xbf16, #tpu.memory_space<vmem>>, vector<1x8x32xbf16>
    %38 = vector.shape_cast %37 : vector<1x8x32xbf16> to vector<8x32xbf16>
    %cst_18 = arith.constant dense<0.000000e+00> : vector<8x32xf32>
    %39 = tpu.matmul %36, %38, %cst_18 {dimension_numbers = #tpu.dot_dimension_numbers<[1], [0], [0], [1], [0, 0, 1, 1], [], []>} : vector<8x8xbf16>, vector<8x32xbf16>, vector<8x32xf32> -> vector<8x32xf32>
    %40 = arith.addf %12, %39 : vector<8x32xf32>
    %41 = vector.extract_strided_slice %8 {offsets = [0, 8], sizes = [8, 8], strides = [1, 1]} : vector<8x96xbf16> to vector<8x8xbf16>
    %42 = vector.shape_cast %41 : vector<8x8xbf16> to vector<1x8x8xbf16>
    %43 = vector.extract_strided_slice %8 {offsets = [0, 40], sizes = [8, 8], strides = [1, 1]} : vector<8x96xbf16> to vector<8x8xbf16>
    %44 = vector.shape_cast %43 : vector<8x8xbf16> to vector<1x8x8xbf16>
    %45 = vector.extract_strided_slice %8 {offsets = [0, 72], sizes = [8, 8], strides = [1, 1]} : vector<8x96xbf16> to vector<8x8xbf16>
    %46 = vector.shape_cast %45 : vector<8x8xbf16> to vector<1x8x8xbf16>
    "tpu.trace_start"() <{level = 10 : i32, message = "bqd,bkd->bqk"}> : () -> ()
    %cst_19 = arith.constant dense<0.000000e+00> : vector<1x8x8xf32>
    %47 = tpu.matmul %42, %44, %cst_19 {dimension_numbers = #tpu.dot_dimension_numbers<[2], [2], [1], [1], [0, 0, 0, 1, 1, 1], [0], [0]>} : vector<1x8x8xbf16>, vector<1x8x8xbf16>, vector<1x8x8xf32> -> vector<1x8x8xf32>
    "tpu.trace_stop"() : () -> ()
    %cst_20 = arith.constant 0.353553385 : f32
    %48 = vector.broadcast %cst_20 : f32 to vector<1x8x8xf32>
    %49 = arith.mulf %47, %48 : vector<1x8x8xf32>
    %50 = arith.addf %49, %11 : vector<1x8x8xf32>
    %cst_21 = arith.constant dense<0xFF800000> : vector<1x8xf32>
    %51 = vector.multi_reduction <maximumf>, %50, %cst_21 [2] : vector<1x8x8xf32> to vector<1x8xf32>
    %52 = vector.shape_cast %51 : vector<1x8xf32> to vector<1x8x1xf32>
    %53 = vector.broadcast %52 : vector<1x8x1xf32> to vector<1x8x8xf32>
    %54 = arith.subf %50, %53 : vector<1x8x8xf32>
    %55 = math.exp %54 : vector<1x8x8xf32>
    %cst_22 = arith.constant dense<0.000000e+00> : vector<1x8xf32>
    %56 = vector.multi_reduction <add>, %55, %cst_22 [2] : vector<1x8x8xf32> to vector<1x8xf32>
    %57 = vector.shape_cast %56 : vector<1x8xf32> to vector<1x8x1xf32>
    %58 = tpu.reciprocal %57 {approx = true} : vector<1x8x1xf32> -> vector<1x8x1xf32>
    %59 = vector.broadcast %58 : vector<1x8x1xf32> to vector<1x8x8xf32>
    %60 = arith.mulf %55, %59 : vector<1x8x8xf32>
    %61 = arith.truncf %60 : vector<1x8x8xf32> to vector<1x8x8xbf16>
    "tpu.trace_start"() <{level = 10 : i32, message = "bqk,bkd->bqd"}> : () -> ()
    %cst_23 = arith.constant dense<0.000000e+00> : vector<1x8x8xf32>
    %62 = tpu.matmul %61, %46, %cst_23 {dimension_numbers = #tpu.dot_dimension_numbers<[2], [1], [1], [2], [0, 0, 0, 1, 1, 2], [0], [0]>} : vector<1x8x8xbf16>, vector<1x8x8xbf16>, vector<1x8x8xf32> -> vector<1x8x8xf32>
    "tpu.trace_stop"() : () -> ()
    %63 = vector.shape_cast %62 : vector<1x8x8xf32> to vector<8x8xf32>
    %64 = arith.truncf %63 : vector<8x8xf32> to vector<8x8xbf16>
    %c1 = arith.constant 1 : index
    %c0_24 = arith.constant 0 : index
    %c0_25 = arith.constant 0 : index
    %65 = vector.load %arg5[%c1, %c0_24, %c0_25] : memref<4x8x32xbf16, #tpu.memory_space<vmem>>, vector<1x8x32xbf16>
    %66 = vector.shape_cast %65 : vector<1x8x32xbf16> to vector<8x32xbf16>
    %cst_26 = arith.constant dense<0.000000e+00> : vector<8x32xf32>
    %67 = tpu.matmul %64, %66, %cst_26 {dimension_numbers = #tpu.dot_dimension_numbers<[1], [0], [0], [1], [0, 0, 1, 1], [], []>} : vector<8x8xbf16>, vector<8x32xbf16>, vector<8x32xf32> -> vector<8x32xf32>
    %68 = arith.addf %40, %67 : vector<8x32xf32>
    %69 = vector.extract_strided_slice %8 {offsets = [0, 16], sizes = [8, 8], strides = [1, 1]} : vector<8x96xbf16> to vector<8x8xbf16>
    %70 = vector.shape_cast %69 : vector<8x8xbf16> to vector<1x8x8xbf16>
    %71 = vector.extract_strided_slice %8 {offsets = [0, 48], sizes = [8, 8], strides = [1, 1]} : vector<8x96xbf16> to vector<8x8xbf16>
    %72 = vector.shape_cast %71 : vector<8x8xbf16> to vector<1x8x8xbf16>
    %73 = vector.extract_strided_slice %8 {offsets = [0, 80], sizes = [8, 8], strides = [1, 1]} : vector<8x96xbf16> to vector<8x8xbf16>
    %74 = vector.shape_cast %73 : vector<8x8xbf16> to vector<1x8x8xbf16>
    "tpu.trace_start"() <{level = 10 : i32, message = "bqd,bkd->bqk"}> : () -> ()
    %cst_27 = arith.constant dense<0.000000e+00> : vector<1x8x8xf32>
    %75 = tpu.matmul %70, %72, %cst_27 {dimension_numbers = #tpu.dot_dimension_numbers<[2], [2], [1], [1], [0, 0, 0, 1, 1, 1], [0], [0]>} : vector<1x8x8xbf16>, vector<1x8x8xbf16>, vector<1x8x8xf32> -> vector<1x8x8xf32>
    "tpu.trace_stop"() : () -> ()
    %cst_28 = arith.constant 0.353553385 : f32
    %76 = vector.broadcast %cst_28 : f32 to vector<1x8x8xf32>
    %77 = arith.mulf %75, %76 : vector<1x8x8xf32>
    %78 = arith.addf %77, %11 : vector<1x8x8xf32>
    %cst_29 = arith.constant dense<0xFF800000> : vector<1x8xf32>
    %79 = vector.multi_reduction <maximumf>, %78, %cst_29 [2] : vector<1x8x8xf32> to vector<1x8xf32>
    %80 = vector.shape_cast %79 : vector<1x8xf32> to vector<1x8x1xf32>
    %81 = vector.broadcast %80 : vector<1x8x1xf32> to vector<1x8x8xf32>
    %82 = arith.subf %78, %81 : vector<1x8x8xf32>
    %83 = math.exp %82 : vector<1x8x8xf32>
    %cst_30 = arith.constant dense<0.000000e+00> : vector<1x8xf32>
    %84 = vector.multi_reduction <add>, %83, %cst_30 [2] : vector<1x8x8xf32> to vector<1x8xf32>
    %85 = vector.shape_cast %84 : vector<1x8xf32> to vector<1x8x1xf32>
    %86 = tpu.reciprocal %85 {approx = true} : vector<1x8x1xf32> -> vector<1x8x1xf32>
    %87 = vector.broadcast %86 : vector<1x8x1xf32> to vector<1x8x8xf32>
    %88 = arith.mulf %83, %87 : vector<1x8x8xf32>
    %89 = arith.truncf %88 : vector<1x8x8xf32> to vector<1x8x8xbf16>
    "tpu.trace_start"() <{level = 10 : i32, message = "bqk,bkd->bqd"}> : () -> ()
    %cst_31 = arith.constant dense<0.000000e+00> : vector<1x8x8xf32>
    %90 = tpu.matmul %89, %74, %cst_31 {dimension_numbers = #tpu.dot_dimension_numbers<[2], [1], [1], [2], [0, 0, 0, 1, 1, 2], [0], [0]>} : vector<1x8x8xbf16>, vector<1x8x8xbf16>, vector<1x8x8xf32> -> vector<1x8x8xf32>
    "tpu.trace_stop"() : () -> ()
    %91 = vector.shape_cast %90 : vector<1x8x8xf32> to vector<8x8xf32>
    %92 = arith.truncf %91 : vector<8x8xf32> to vector<8x8xbf16>
    %c2 = arith.constant 2 : index
    %c0_32 = arith.constant 0 : index
    %c0_33 = arith.constant 0 : index
    %93 = vector.load %arg5[%c2, %c0_32, %c0_33] : memref<4x8x32xbf16, #tpu.memory_space<vmem>>, vector<1x8x32xbf16>
    %94 = vector.shape_cast %93 : vector<1x8x32xbf16> to vector<8x32xbf16>
    %cst_34 = arith.constant dense<0.000000e+00> : vector<8x32xf32>
    %95 = tpu.matmul %92, %94, %cst_34 {dimension_numbers = #tpu.dot_dimension_numbers<[1], [0], [0], [1], [0, 0, 1, 1], [], []>} : vector<8x8xbf16>, vector<8x32xbf16>, vector<8x32xf32> -> vector<8x32xf32>
    %96 = arith.addf %68, %95 : vector<8x32xf32>
    %97 = vector.extract_strided_slice %8 {offsets = [0, 24], sizes = [8, 8], strides = [1, 1]} : vector<8x96xbf16> to vector<8x8xbf16>
    %98 = vector.shape_cast %97 : vector<8x8xbf16> to vector<1x8x8xbf16>
    %99 = vector.extract_strided_slice %8 {offsets = [0, 56], sizes = [8, 8], strides = [1, 1]} : vector<8x96xbf16> to vector<8x8xbf16>
    %100 = vector.shape_cast %99 : vector<8x8xbf16> to vector<1x8x8xbf16>
    %101 = vector.extract_strided_slice %8 {offsets = [0, 88], sizes = [8, 8], strides = [1, 1]} : vector<8x96xbf16> to vector<8x8xbf16>
    %102 = vector.shape_cast %101 : vector<8x8xbf16> to vector<1x8x8xbf16>
    "tpu.trace_start"() <{level = 10 : i32, message = "bqd,bkd->bqk"}> : () -> ()
    %cst_35 = arith.constant dense<0.000000e+00> : vector<1x8x8xf32>
    %103 = tpu.matmul %98, %100, %cst_35 {dimension_numbers = #tpu.dot_dimension_numbers<[2], [2], [1], [1], [0, 0, 0, 1, 1, 1], [0], [0]>} : vector<1x8x8xbf16>, vector<1x8x8xbf16>, vector<1x8x8xf32> -> vector<1x8x8xf32>
    "tpu.trace_stop"() : () -> ()
    %cst_36 = arith.constant 0.353553385 : f32
    %104 = vector.broadcast %cst_36 : f32 to vector<1x8x8xf32>
    %105 = arith.mulf %103, %104 : vector<1x8x8xf32>
    %106 = arith.addf %105, %11 : vector<1x8x8xf32>
    %cst_37 = arith.constant dense<0xFF800000> : vector<1x8xf32>
    %107 = vector.multi_reduction <maximumf>, %106, %cst_37 [2] : vector<1x8x8xf32> to vector<1x8xf32>
    %108 = vector.shape_cast %107 : vector<1x8xf32> to vector<1x8x1xf32>
    %109 = vector.broadcast %108 : vector<1x8x1xf32> to vector<1x8x8xf32>
    %110 = arith.subf %106, %109 : vector<1x8x8xf32>
    %111 = math.exp %110 : vector<1x8x8xf32>
    %cst_38 = arith.constant dense<0.000000e+00> : vector<1x8xf32>
    %112 = vector.multi_reduction <add>, %111, %cst_38 [2] : vector<1x8x8xf32> to vector<1x8xf32>
    %113 = vector.shape_cast %112 : vector<1x8xf32> to vector<1x8x1xf32>
    %114 = tpu.reciprocal %113 {approx = true} : vector<1x8x1xf32> -> vector<1x8x1xf32>
    %115 = vector.broadcast %114 : vector<1x8x1xf32> to vector<1x8x8xf32>
    %116 = arith.mulf %111, %115 : vector<1x8x8xf32>
    %117 = arith.truncf %116 : vector<1x8x8xf32> to vector<1x8x8xbf16>
    "tpu.trace_start"() <{level = 10 : i32, message = "bqk,bkd->bqd"}> : () -> ()
    %cst_39 = arith.constant dense<0.000000e+00> : vector<1x8x8xf32>
    %118 = tpu.matmul %117, %102, %cst_39 {dimension_numbers = #tpu.dot_dimension_numbers<[2], [1], [1], [2], [0, 0, 0, 1, 1, 2], [0], [0]>} : vector<1x8x8xbf16>, vector<1x8x8xbf16>, vector<1x8x8xf32> -> vector<1x8x8xf32>
    "tpu.trace_stop"() : () -> ()
    %119 = vector.shape_cast %118 : vector<1x8x8xf32> to vector<8x8xf32>
    %120 = arith.truncf %119 : vector<8x8xf32> to vector<8x8xbf16>
    %c3 = arith.constant 3 : index
    %c0_40 = arith.constant 0 : index
    %c0_41 = arith.constant 0 : index
    %121 = vector.load %arg5[%c3, %c0_40, %c0_41] : memref<4x8x32xbf16, #tpu.memory_space<vmem>>, vector<1x8x32xbf16>
    %122 = vector.shape_cast %121 : vector<1x8x32xbf16> to vector<8x32xbf16>
    %cst_42 = arith.constant dense<0.000000e+00> : vector<8x32xf32>
    %123 = tpu.matmul %120, %122, %cst_42 {dimension_numbers = #tpu.dot_dimension_numbers<[1], [0], [0], [1], [0, 0, 1, 1], [], []>} : vector<8x8xbf16>, vector<8x32xbf16>, vector<8x32xf32> -> vector<8x32xf32>
    %124 = arith.addf %96, %123 : vector<8x32xf32>
    %125 = arith.addf %2, %124 : vector<8x32xf32>
    %c0_43 = arith.constant 0 : index
    %c0_44 = arith.constant 0 : index
    %126 = vector.load %arg6[%c0_43, %c0_44] : memref<1x32xf32, #tpu.memory_space<vmem>>, vector<1x32xf32>
    %127 = vector.broadcast %126 : vector<1x32xf32> to vector<8x32xf32>
    %128 = arith.addf %125, %127 : vector<8x32xf32>
    %c0_45 = arith.constant 0 : index
    %c0_46 = arith.constant 0 : index
    %129 = vector.load %arg7[%c0_45, %c0_46] : memref<1x32xf32, #tpu.memory_space<vmem>>, vector<1x32xf32>
    %c0_47 = arith.constant 0 : index
    %c0_48 = arith.constant 0 : index
    %130 = vector.load %arg8[%c0_47, %c0_48] : memref<1x32xf32, #tpu.memory_space<vmem>>, vector<1x32xf32>
    %cst_49 = arith.constant dense<0.000000e+00> : vector<8xf32>
    %131 = vector.multi_reduction <add>, %128, %cst_49 [1] : vector<8x32xf32> to vector<8xf32>
    %132 = vector.shape_cast %131 : vector<8xf32> to vector<8x1xf32>
    %cst_50 = arith.constant 3.200000e+01 : f32
    %133 = vector.broadcast %cst_50 : f32 to vector<8x1xf32>
    %134 = arith.divf %132, %133 : vector<8x1xf32>
    %135 = vector.broadcast %134 : vector<8x1xf32> to vector<8x32xf32>
    %136 = arith.subf %128, %135 : vector<8x32xf32>
    %137 = vector.broadcast %134 : vector<8x1xf32> to vector<8x32xf32>
    %138 = arith.subf %128, %137 : vector<8x32xf32>
    %139 = arith.mulf %136, %138 : vector<8x32xf32>
    %cst_51 = arith.constant dense<0.000000e+00> : vector<8xf32>
    %140 = vector.multi_reduction <add>, %139, %cst_51 [1] : vector<8x32xf32> to vector<8xf32>
    %141 = vector.shape_cast %140 : vector<8xf32> to vector<8x1xf32>
    %cst_52 = arith.constant 3.200000e+01 : f32
    %142 = vector.broadcast %cst_52 : f32 to vector<8x1xf32>
    %143 = arith.divf %141, %142 : vector<8x1xf32>
    %144 = vector.broadcast %134 : vector<8x1xf32> to vector<8x32xf32>
    %145 = arith.subf %128, %144 : vector<8x32xf32>
    %cst_53 = arith.constant 9.99999974E-6 : f32
    %146 = vector.broadcast %cst_53 : f32 to vector<8x1xf32>
    %147 = arith.addf %143, %146 : vector<8x1xf32>
    %148 = math.rsqrt %147 : vector<8x1xf32>
    %149 = vector.broadcast %148 : vector<8x1xf32> to vector<8x32xf32>
    %150 = arith.mulf %145, %149 : vector<8x32xf32>
    %151 = vector.broadcast %129 : vector<1x32xf32> to vector<8x32xf32>
    %152 = arith.mulf %150, %151 : vector<8x32xf32>
    %153 = vector.broadcast %130 : vector<1x32xf32> to vector<8x32xf32>
    %154 = arith.addf %152, %153 : vector<8x32xf32>
    %155 = arith.truncf %154 : vector<8x32xf32> to vector<8x32xbf16>
    %c0_54 = arith.constant 0 : index
    %c0_55 = arith.constant 0 : index
    %156 = vector.load %arg9[%c0_54, %c0_55] : memref<32x64xbf16, #tpu.memory_space<vmem>>, vector<32x64xbf16>
    %cst_56 = arith.constant dense<0.000000e+00> : vector<8x64xf32>
    %157 = tpu.matmul %155, %156, %cst_56 {dimension_numbers = #tpu.dot_dimension_numbers<[1], [0], [0], [1], [0, 0, 1, 1], [], []>} : vector<8x32xbf16>, vector<32x64xbf16>, vector<8x64xf32> -> vector<8x64xf32>
    %c0_57 = arith.constant 0 : index
    %c0_58 = arith.constant 0 : index
    %158 = vector.load %arg10[%c0_57, %c0_58] : memref<1x64xf32, #tpu.memory_space<vmem>>, vector<1x64xf32>
    %159 = vector.broadcast %158 : vector<1x64xf32> to vector<8x64xf32>
    %160 = arith.addf %157, %159 : vector<8x64xf32>
    %cst_59 = arith.constant 5.000000e-01 : f32
    %161 = vector.broadcast %cst_59 : f32 to vector<8x64xf32>
    %162 = arith.mulf %161, %160 : vector<8x64xf32>
    %cst_60 = arith.constant 4.471500e-02 : f32
    %163 = vector.broadcast %cst_60 : f32 to vector<8x64xf32>
    %164 = arith.mulf %163, %160 : vector<8x64xf32>
    %165 = arith.mulf %164, %160 : vector<8x64xf32>
    %166 = arith.mulf %165, %160 : vector<8x64xf32>
    %167 = arith.addf %160, %166 : vector<8x64xf32>
    %cst_61 = arith.constant 0.797884583 : f32
    %168 = vector.broadcast %cst_61 : f32 to vector<8x64xf32>
    %169 = arith.mulf %168, %167 : vector<8x64xf32>
    %170 = math.tanh %169 : vector<8x64xf32>
    %cst_62 = arith.constant 1.000000e+00 : f32
    %171 = vector.broadcast %cst_62 : f32 to vector<8x64xf32>
    %172 = arith.addf %171, %170 : vector<8x64xf32>
    %173 = arith.mulf %162, %172 : vector<8x64xf32>
    %174 = arith.truncf %173 : vector<8x64xf32> to vector<8x64xbf16>
    %c0_63 = arith.constant 0 : index
    %c0_64 = arith.constant 0 : index
    %175 = vector.load %arg11[%c0_63, %c0_64] : memref<64x32xbf16, #tpu.memory_space<vmem>>, vector<64x32xbf16>
    %cst_65 = arith.constant dense<0.000000e+00> : vector<8x32xf32>
    %176 = tpu.matmul %174, %175, %cst_65 {dimension_numbers = #tpu.dot_dimension_numbers<[1], [0], [0], [1], [0, 0, 1, 1], [], []>} : vector<8x64xbf16>, vector<64x32xbf16>, vector<8x32xf32> -> vector<8x32xf32>
    %177 = arith.addf %154, %176 : vector<8x32xf32>
    %c0_66 = arith.constant 0 : index
    %c0_67 = arith.constant 0 : index
    %178 = vector.load %arg12[%c0_66, %c0_67] : memref<1x32xf32, #tpu.memory_space<vmem>>, vector<1x32xf32>
    %179 = vector.broadcast %178 : vector<1x32xf32> to vector<8x32xf32>
    %180 = arith.addf %177, %179 : vector<8x32xf32>
    %c0_68 = arith.constant 0 : index
    %c0_69 = arith.constant 0 : index
    %181 = vector.load %arg13[%c0_68, %c0_69] : memref<1x32xf32, #tpu.memory_space<vmem>>, vector<1x32xf32>
    %c0_70 = arith.constant 0 : index
    %c0_71 = arith.constant 0 : index
    %182 = vector.load %arg14[%c0_70, %c0_71] : memref<1x32xf32, #tpu.memory_space<vmem>>, vector<1x32xf32>
    %cst_72 = arith.constant dense<0.000000e+00> : vector<8xf32>
    %183 = vector.multi_reduction <add>, %180, %cst_72 [1] : vector<8x32xf32> to vector<8xf32>
    %184 = vector.shape_cast %183 : vector<8xf32> to vector<8x1xf32>
    %cst_73 = arith.constant 3.200000e+01 : f32
    %185 = vector.broadcast %cst_73 : f32 to vector<8x1xf32>
    %186 = arith.divf %184, %185 : vector<8x1xf32>
    %187 = vector.broadcast %186 : vector<8x1xf32> to vector<8x32xf32>
    %188 = arith.subf %180, %187 : vector<8x32xf32>
    %189 = vector.broadcast %186 : vector<8x1xf32> to vector<8x32xf32>
    %190 = arith.subf %180, %189 : vector<8x32xf32>
    %191 = arith.mulf %188, %190 : vector<8x32xf32>
    %cst_74 = arith.constant dense<0.000000e+00> : vector<8xf32>
    %192 = vector.multi_reduction <add>, %191, %cst_74 [1] : vector<8x32xf32> to vector<8xf32>
    %193 = vector.shape_cast %192 : vector<8xf32> to vector<8x1xf32>
    %cst_75 = arith.constant 3.200000e+01 : f32
    %194 = vector.broadcast %cst_75 : f32 to vector<8x1xf32>
    %195 = arith.divf %193, %194 : vector<8x1xf32>
    %196 = vector.broadcast %186 : vector<8x1xf32> to vector<8x32xf32>
    %197 = arith.subf %180, %196 : vector<8x32xf32>
    %cst_76 = arith.constant 9.99999974E-6 : f32
    %198 = vector.broadcast %cst_76 : f32 to vector<8x1xf32>
    %199 = arith.addf %195, %198 : vector<8x1xf32>
    %200 = math.rsqrt %199 : vector<8x1xf32>
    %201 = vector.broadcast %200 : vector<8x1xf32> to vector<8x32xf32>
    %202 = arith.mulf %197, %201 : vector<8x32xf32>
    %203 = vector.broadcast %181 : vector<1x32xf32> to vector<8x32xf32>
    %204 = arith.mulf %202, %203 : vector<8x32xf32>
    %205 = vector.broadcast %182 : vector<1x32xf32> to vector<8x32xf32>
    %206 = arith.addf %204, %205 : vector<8x32xf32>
    %207 = vector.shape_cast %206 : vector<8x32xf32> to vector<1x8x32xf32>
    %208 = arith.truncf %207 : vector<1x8x32xf32> to vector<1x8x32xbf16>
    %c0_77 = arith.constant 0 : index
    %c0_78 = arith.constant 0 : index
    %c0_79 = arith.constant 0 : index
    %209 = vector.load %arg15[%c0_77, %c0_78, %c0_79] : memref<1x8x32xbf16, #tpu.memory_space<vmem>>, vector<1x8x32xbf16>
    tpu.vector_store %arg15[%c0_77, %c0_78, %c0_79], %208 {strides = array<i32>} : memref<1x8x32xbf16, #tpu.memory_space<vmem>>, vector<1x8x32xbf16>,
    return
  }
  func.func @transform_0(%arg0: i32) -> (i32, i32, i32) {
    %c0_i32 = arith.constant 0 : i32
    %c0_i32_0 = arith.constant 0 : i32
    %c0_i32_1 = arith.constant 0 : i32
    return %arg0, %c0_i32, %c0_i32_0 : i32, i32, i32
  }
  func.func @transform_1(%arg0: i32) -> (i32, i32, i32) {
    %c0_i32 = arith.constant 0 : i32
    %c0_i32_0 = arith.constant 0 : i32
    %c0_i32_1 = arith.constant 0 : i32
    return %arg0, %c0_i32, %c0_i32_0 : i32, i32, i32
  }
  func.func @transform_2(%arg0: i32) -> (i32, i32) {
    %c0_i32 = arith.constant 0 : i32
    %c0_i32_0 = arith.constant 0 : i32
    %c0_i32_1 = arith.constant 0 : i32
    return %c0_i32, %c0_i32_0 : i32, i32
  }
  func.func @transform_3(%arg0: i32) -> (i32, i32) {
    %c0_i32 = arith.constant 0 : i32
    %c0_i32_0 = arith.constant 0 : i32
    %c0_i32_1 = arith.constant 0 : i32
    return %c0_i32, %c0_i32_0 : i32, i32
  }
  func.func @transform_4(%arg0: i32) -> (i32, i32, i32) {
    %c0_i32 = arith.constant 0 : i32
    %c0_i32_0 = arith.constant 0 : i32
    %c0_i32_1 = arith.constant 0 : i32
    %c0_i32_2 = arith.constant 0 : i32
    return %c0_i32, %c0_i32_0, %c0_i32_1 : i32, i32, i32
  }
  func.func @transform_5(%arg0: i32) -> (i32, i32) {
    %c0_i32 = arith.constant 0 : i32
    %c0_i32_0 = arith.constant 0 : i32
    %c0_i32_1 = arith.constant 0 : i32
    return %c0_i32, %c0_i32_0 : i32, i32
  }
  func.func @transform_6(%arg0: i32) -> (i32, i32) {
    %c0_i32 = arith.constant 0 : i32
    %c0_i32_0 = arith.constant 0 : i32
    %c0_i32_1 = arith.constant 0 : i32
    return %c0_i32, %c0_i32_0 : i32, i32
  }
  func.func @transform_7(%arg0: i32) -> (i32, i32) {
    %c0_i32 = arith.constant 0 : i32
    %c0_i32_0 = arith.constant 0 : i32
    %c0_i32_1 = arith.constant 0 : i32
    return %c0_i32, %c0_i32_0 : i32, i32
  }
  func.func @transform_8(%arg0: i32) -> (i32, i32) {
    %c0_i32 = arith.constant 0 : i32
    %c0_i32_0 = arith.constant 0 : i32
    %c0_i32_1 = arith.constant 0 : i32
    return %c0_i32, %c0_i32_0 : i32, i32
  }
  func.func @transform_9(%arg0: i32) -> (i32, i32) {
    %c0_i32 = arith.constant 0 : i32
    %c0_i32_0 = arith.constant 0 : i32
    %c0_i32_1 = arith.constant 0 : i32
    return %c0_i32, %c0_i32_0 : i32, i32
  }
  func.func @transform_10(%arg0: i32) -> (i32, i32) {
    %c0_i32 = arith.constant 0 : i32
    %c0_i32_0 = arith.constant 0 : i32
    %c0_i32_1 = arith.constant 0 : i32
    return %c0_i32, %c0_i32_0 : i32, i32
  }
  func.func @transform_11(%arg0: i32) -> (i32, i32) {
    %c0_i32 = arith.constant 0 : i32
    %c0_i32_0 = arith.constant 0 : i32
    %c0_i32_1 = arith.constant 0 : i32
    return %c0_i32, %c0_i32_0 : i32, i32
  }
  func.func @transform_12(%arg0: i32) -> (i32, i32) {
    %c0_i32 = arith.constant 0 : i32
    %c0_i32_0 = arith.constant 0 : i32
    %c0_i32_1 = arith.constant 0 : i32
    return %c0_i32, %c0_i32_0 : i32, i32
  }
  func.func @transform_13(%arg0: i32) -> (i32, i32) {
    %c0_i32 = arith.constant 0 : i32
    %c0_i32_0 = arith.constant 0 : i32
    %c0_i32_1 = arith.constant 0 : i32
    return %c0_i32, %c0_i32_0 : i32, i32
  }
  func.func @transform_14(%arg0: i32) -> (i32, i32, i32) {
    %c0_i32 = arith.constant 0 : i32
    %c0_i32_0 = arith.constant 0 : i32
    %c0_i32_1 = arith.constant 0 : i32
    return %arg0, %c0_i32, %c0_i32_0 : i32, i32, i32
  }
}

</mosaic_0001>

<llo_original>
// kernel: tpu_custom_call.1
$region0: #{tpu_custom_call.1}
  #allocation0 [shape = 'u32[]', space=smem, size = 0x4, offset = 0x4, fixed_abs, tag = 'smem constant byte address 0x4 - core index']
  #allocation1 [shape = 'u32[144,128]{1,0:T(1,128)}', space=vmem, size = 0x12000, scoped, tag = 'internal scratch']
  %s0 = inlined_call_operand.hbm [shape: bf16[2,8,32], index: 0, kind: input, shape index: {}]
  %s1 = inlined_call_operand.hbm [shape: f32[2,1,8], index: 1, kind: input, shape index: {}]
  %s2 = inlined_call_operand.vmem [shape: bf16[32,96], index: 2, kind: input, shape index: {}]
  %s3 = inlined_call_operand.vmem [shape: f32[1,96], index: 3, kind: input, shape index: {}]
  %s4 = inlined_call_operand.vmem [shape: bf16[4,8,32], index: 4, kind: input, shape index: {}]
  %s5 = inlined_call_operand.vmem [shape: f32[1,32], index: 5, kind: input, shape index: {}]
  %s6 = inlined_call_operand.hbm [shape: f32[1,32], index: 6, kind: input, shape index: {}]
  %s7 = inlined_call_operand.hbm [shape: f32[1,32], index: 7, kind: input, shape index: {}]
  %s8 = inlined_call_operand.vmem [shape: bf16[32,64], index: 8, kind: input, shape index: {}]
  %s9 = inlined_call_operand.hbm [shape: f32[1,64], index: 9, kind: input, shape index: {}]
  %s10 = inlined_call_operand.vmem [shape: bf16[64,32], index: 10, kind: input, shape index: {}]
  %s11 = inlined_call_operand.vmem [shape: f32[1,32], index: 11, kind: input, shape index: {}]
  %s12 = inlined_call_operand.vmem [shape: f32[1,32], index: 12, kind: input, shape index: {}]
  %s13 = inlined_call_operand.vmem [shape: f32[1,32], index: 13, kind: input, shape index: {}]
  %s14 = inlined_call_operand.hbm [shape: bf16[2,8,32], index: 14, kind: output, shape index: {}]
  %s15 = sld [smem:[#allocation0]]
  $region109: #{tpu_custom_call.1} parent=0
    _
  %s17 = ssub.s32 1, %s15
  %s18 = scalar_select 0, %s17, %s15
  $region1: #{tpu_custom_call.1} parent=0
    #allocation2 [shape = 'u8[4096]{0}', space=vmem, size = 0x1000, scoped, tag = 'input window, operand 0']
    #allocation3 [shape = 's32[2]{0}', space=sflag, size = 0x8, scoped, tag = 'scoped memory for tpu_custom_call.1']
    #allocation4 [shape = 's32[2]{0}', space=sflag, size = 0x8, scoped, tag = 'scoped memory for tpu_custom_call.1']
    #allocation5 [shape = 'u8[1024]{0}', space=vmem, size = 0x400, scoped, tag = 'input window, operand 1']
    #allocation6 [shape = 's32[2]{0}', space=sflag, size = 0x8, scoped, tag = 'scoped memory for tpu_custom_call.1']
    #allocation7 [shape = 'u8[512]{0}', space=vmem, size = 0x400, scoped, tag = 'input window, operand 6, single buffered']
    #allocation8 [shape = 'u8[512]{0}', space=vmem, size = 0x400, scoped, tag = 'input window, operand 7, single buffered']
    #allocation9 [shape = 's32[1]{0}', space=sflag, size = 0x4, scoped, tag = 'scoped memory for tpu_custom_call.1']
    #allocation10 [shape = 'u8[512]{0}', space=vmem, size = 0x400, scoped, tag = 'input window, operand 9, single buffered']
    #allocation11 [shape = 'u8[4096]{0}', space=vmem, size = 0x1000, scoped, tag = 'output window, operand 0']
    %19 = vsyncpa [#allocation3], 0
    %s20 = scalar_lea.sflag [#allocation3], 1
    %21 = vsyncpa %s20, 0
    %22 = vsyncpa [#allocation6], 0
    %s23 = scalar_lea.sflag [#allocation6], 1
    %24 = vsyncpa %s23, 0
    %25 = vsyncpa [#allocation9], 0
    %26 = vsyncpa [#allocation4], 0
    %s27 = scalar_lea.sflag [#allocation4], 1
    %28 = vsyncpa %s27, 0
    loop: start=0, step=1, limit=4
    $region2: #{tpu_custom_call.1} parent=1 // loop_pre_header
      _
    $region3: #{tpu_custom_call.1} parent=1 // loop_header
      %s30 = sphi 0, %s34
      %p31 = scmp.ge.s32.totalorder %s30, 4
      %s40 = sphi 0, %s42
      %s43 = sphi 0, %s40
      %s44 = sphi 0, %s43
      %s60 = sphi 0, %s44
      %s66 = sphi 0, %s68
      %s69 = sphi 0, %s66
      %s70 = sphi 0, %s69
      %s86 = sphi 0, %s70
      %s90 = sphi 0, %s90
      %s92 = sphi 0, %s90
      %s93 = sphi 0, %s92
      %s107 = sphi 0, %s93
      %s111 = sphi 0, %s111
      %s113 = sphi 0, %s111
      %s114 = sphi 0, %s113
      %s128 = sphi 0, %s114
      %s132 = sphi 0, %s132
      %s134 = sphi 0, %s132
      %s135 = sphi 0, %s134
      %s149 = sphi 0, %s135
      %s153 = sphi 0, %s153
      %s155 = sphi 0, %s153
      %s156 = sphi 0, %s155
      %s170 = sphi 0, %s156
      %s174 = sphi 0, %s174
      %s176 = sphi 0, %s174
      %s177 = sphi 0, %s176
      %s191 = sphi 0, %s177
      %s195 = sphi 0, %s195
      %s197 = sphi 0, %s195
      %s198 = sphi 0, %s197
      %s212 = sphi 0, %s198
      %s216 = sphi 0, %s216
      %s218 = sphi 0, %s216
      %s219 = sphi 0, %s218
      %s233 = sphi 0, %s219
      %s237 = sphi 0, %s237
      %s239 = sphi 0, %s237
      %s240 = sphi 0, %s239
      %s254 = sphi 0, %s240
      %s258 = sphi 0, %s258
      %s260 = sphi 0, %s258
      %s261 = sphi 0, %s260
      %s275 = sphi 0, %s261
      %s279 = sphi 0, %s279
      %s281 = sphi 0, %s279
      %s282 = sphi 0, %s281
      %s296 = sphi 0, %s282
      %s300 = sphi 0, %s300
      %s302 = sphi 0, %s300
      %s303 = sphi 0, %s302
      %s317 = sphi 0, %s303
      %s321 = sphi 0, %s321
      %s323 = sphi 0, %s321
      %s324 = sphi 0, %s323
      %s338 = sphi 0, %s324
      %s344 = sphi 0, %s346
      %s347 = sphi 0, %s344
      %s348 = sphi 0, %s347
      %s364 = sphi 0, %s348
    $region4: #{tpu_custom_call.1} parent=1 // loop_header_branch
      %33 = sbr.rel (%p31) target = $region8
    $region5: #{tpu_custom_call.1} parent=1 // loop_body
      %s35 = ssub.s32 %s30, 1
      %s36 = ssub.s32 %s30, 2
      %s37 = sadd.s32 %s30, 1
      %s38 = ssub.s32 %s30, %s37
      %p39 = scmp.eq.s32.totalorder %s38, 0
      %s41 = sadd.s32 %s40, 1
      %s42 = scalar_select %p39, %s40, %s41
      %p45 = pneg %p39
      %p46 = scmp.eq.s32.totalorder %s30, 1
      %p47 = por %p45, %p46
      %p48 = scmp.ne.s32.totalorder %s40, %s43
      %p49 = scmp.eq.s32.totalorder %s30, 0
      %p50 = por %p48, %p49
      %p51 = scmp.ne.s32.totalorder %s40, %s43
      %p52 = scmp.eq.s32.totalorder %s35, 1
      %p53 = por %p51, %p52
      %p54 = scmp.ne.s32.totalorder %s43, %s44
      %p55 = scmp.eq.s32.totalorder %s35, 0
      %p56 = por %p54, %p55
      %p57 = scmp.ne.s32.totalorder %s43, %s44
      %p58 = scmp.eq.s32.totalorder %s36, 1
      %p59 = por %p57, %p58
      %p61 = scmp.ne.s32.totalorder %s44, %s60
      %p62 = scmp.eq.s32.totalorder %s36, 0
      %p63 = por %p61, %p62
      %s64 = ssub.s32 %s30, %s37
      %p65 = scmp.eq.s32.totalorder %s64, 0
      %s67 = sadd.s32 %s66, 1
      %s68 = scalar_select %p65, %s66, %s67
      %p71 = pneg %p65
      %p72 = scmp.eq.s32.totalorder %s30, 1
      %p73 = por %p71, %p72
      %p74 = scmp.ne.s32.totalorder %s66, %s69
      %p75 = scmp.eq.s32.totalorder %s30, 0
      %p76 = por %p74, %p75
      %p77 = scmp.ne.s32.totalorder %s66, %s69
      %p78 = scmp.eq.s32.totalorder %s35, 1
      %p79 = por %p77, %p78
      %p80 = scmp.ne.s32.totalorder %s69, %s70
      %p81 = scmp.eq.s32.totalorder %s35, 0
      %p82 = por %p80, %p81
      %p83 = scmp.ne.s32.totalorder %s69, %s70
      %p84 = scmp.eq.s32.totalorder %s36, 1
      %p85 = por %p83, %p84
      %p87 = scmp.ne.s32.totalorder %s70, %s86
      %p88 = scmp.eq.s32.totalorder %s36, 0
      %p89 = por %p87, %p88
      %s91 = sadd.s32 %s90, 1
      %p94 = scmp.eq.s32.totalorder %s30, 1
      %p95 = scmp.ne.s32.totalorder %s90, %s92
      %p96 = scmp.eq.s32.totalorder %s30, 0
      %p97 = por %p95, %p96
      %p98 = scmp.ne.s32.totalorder %s90, %s92
      %p99 = scmp.eq.s32.totalorder %s35, 1
      %p100 = por %p98, %p99
      %p101 = scmp.ne.s32.totalorder %s92, %s93
      %p102 = scmp.eq.s32.totalorder %s35, 0
      %p103 = por %p101, %p102
      %p104 = scmp.ne.s32.totalorder %s92, %s93
      %p105 = scmp.eq.s32.totalorder %s36, 1
      %p106 = por %p104, %p105
      %p108 = scmp.ne.s32.totalorder %s93, %s107
      %p109 = scmp.eq.s32.totalorder %s36, 0
      %p110 = por %p108, %p109
      %s112 = sadd.s32 %s111, 1
      %p115 = scmp.eq.s32.totalorder %s30, 1
      %p116 = scmp.ne.s32.totalorder %s111, %s113
      %p117 = scmp.eq.s32.totalorder %s30, 0
      %p118 = por %p116, %p117
      %p119 = scmp.ne.s32.totalorder %s111, %s113
      %p120 = scmp.eq.s32.totalorder %s35, 1
      %p121 = por %p119, %p120
      %p122 = scmp.ne.s32.totalorder %s113, %s114
      %p123 = scmp.eq.s32.totalorder %s35, 0
      %p124 = por %p122, %p123
      %p125 = scmp.ne.s32.totalorder %s113, %s114
      %p126 = scmp.eq.s32.totalorder %s36, 1
      %p127 = por %p125, %p126
      %p129 = scmp.ne.s32.totalorder %s114, %s128
      %p130 = scmp.eq.s32.totalorder %s36, 0
      %p131 = por %p129, %p130
      %s133 = sadd.s32 %s132, 1
      %p136 = scmp.eq.s32.totalorder %s30, 1
      %p137 = scmp.ne.s32.totalorder %s132, %s134
      %p138 = scmp.eq.s32.totalorder %s30, 0
      %p139 = por %p137, %p138
      %p140 = scmp.ne.s32.totalorder %s132, %s134
      %p141 = scmp.eq.s32.totalorder %s35, 1
      %p142 = por %p140, %p141
      %p143 = scmp.ne.s32.totalorder %s134, %s135
      %p144 = scmp.eq.s32.totalorder %s35, 0
      %p145 = por %p143, %p144
      %p146 = scmp.ne.s32.totalorder %s134, %s135
      %p147 = scmp.eq.s32.totalorder %s36, 1
      %p148 = por %p146, %p147
      %p150 = scmp.ne.s32.totalorder %s135, %s149
      %p151 = scmp.eq.s32.totalorder %s36, 0
      %p152 = por %p150, %p151
      %s154 = sadd.s32 %s153, 1
      %p157 = scmp.eq.s32.totalorder %s30, 1
      %p158 = scmp.ne.s32.totalorder %s153, %s155
      %p159 = scmp.eq.s32.totalorder %s30, 0
      %p160 = por %p158, %p159
      %p161 = scmp.ne.s32.totalorder %s153, %s155
      %p162 = scmp.eq.s32.totalorder %s35, 1
      %p163 = por %p161, %p162
      %p164 = scmp.ne.s32.totalorder %s155, %s156
      %p165 = scmp.eq.s32.totalorder %s35, 0
      %p166 = por %p164, %p165
      %p167 = scmp.ne.s32.totalorder %s155, %s156
      %p168 = scmp.eq.s32.totalorder %s36, 1
      %p169 = por %p167, %p168
      %p171 = scmp.ne.s32.totalorder %s156, %s170
      %p172 = scmp.eq.s32.totalorder %s36, 0
      %p173 = por %p171, %p172
      %s175 = sadd.s32 %s174, 1
      %p178 = scmp.eq.s32.totalorder %s30, 1
      %p179 = scmp.ne.s32.totalorder %s174, %s176
      %p180 = scmp.eq.s32.totalorder %s30, 0
      %p181 = por %p179, %p180
      %p182 = scmp.ne.s32.totalorder %s174, %s176
      %p183 = scmp.eq.s32.totalorder %s35, 1
      %p184 = por %p182, %p183
      %p185 = scmp.ne.s32.totalorder %s176, %s177
      %p186 = scmp.eq.s32.totalorder %s35, 0
      %p187 = por %p185, %p186
      %p188 = scmp.ne.s32.totalorder %s176, %s177
      %p189 = scmp.eq.s32.totalorder %s36, 1
      %p190 = por %p188, %p189
      %p192 = scmp.ne.s32.totalorder %s177, %s191
      %p193 = scmp.eq.s32.totalorder %s36, 0
      %p194 = por %p192, %p193
      %s196 = sadd.s32 %s195, 1
      %p199 = scmp.eq.s32.totalorder %s30, 1
      %p200 = scmp.ne.s32.totalorder %s195, %s197
      %p201 = scmp.eq.s32.totalorder %s30, 0
      %p202 = por %p200, %p201
      %p203 = scmp.ne.s32.totalorder %s195, %s197
      %p204 = scmp.eq.s32.totalorder %s35, 1
      %p205 = por %p203, %p204
      %p206 = scmp.ne.s32.totalorder %s197, %s198
      %p207 = scmp.eq.s32.totalorder %s35, 0
      %p208 = por %p206, %p207
      %p209 = scmp.ne.s32.totalorder %s197, %s198
      %p210 = scmp.eq.s32.totalorder %s36, 1
      %p211 = por %p209, %p210
      %p213 = scmp.ne.s32.totalorder %s198, %s212
      %p214 = scmp.eq.s32.totalorder %s36, 0
      %p215 = por %p213, %p214
      %s217 = sadd.s32 %s216, 1
      %p220 = scmp.eq.s32.totalorder %s30, 1
      %p221 = scmp.ne.s32.totalorder %s216, %s218
      %p222 = scmp.eq.s32.totalorder %s30, 0
      %p223 = por %p221, %p222
      %p224 = scmp.ne.s32.totalorder %s216, %s218
      %p225 = scmp.eq.s32.totalorder %s35, 1
      %p226 = por %p224, %p225
      %p227 = scmp.ne.s32.totalorder %s218, %s219
      %p228 = scmp.eq.s32.totalorder %s35, 0
      %p229 = por %p227, %p228
      %p230 = scmp.ne.s32.totalorder %s218, %s219
      %p231 = scmp.eq.s32.totalorder %s36, 1
      %p232 = por %p230, %p231
      %p234 = scmp.ne.s32.totalorder %s219, %s233
      %p235 = scmp.eq.s32.totalorder %s36, 0
      %p236 = por %p234, %p235
      %s238 = sadd.s32 %s237, 1
      %p241 = scmp.eq.s32.totalorder %s30, 1
      %p242 = scmp.ne.s32.totalorder %s237, %s239
      %p243 = scmp.eq.s32.totalorder %s30, 0
      %p244 = por %p242, %p243
      %p245 = scmp.ne.s32.totalorder %s237, %s239
      %p246 = scmp.eq.s32.totalorder %s35, 1
      %p247 = por %p245, %p246
      %p248 = scmp.ne.s32.totalorder %s239, %s240
      %p249 = scmp.eq.s32.totalorder %s35, 0
      %p250 = por %p248, %p249
      %p251 = scmp.ne.s32.totalorder %s239, %s240
      %p252 = scmp.eq.s32.totalorder %s36, 1
      %p253 = por %p251, %p252
      %p255 = scmp.ne.s32.totalorder %s240, %s254
      %p256 = scmp.eq.s32.totalorder %s36, 0
      %p257 = por %p255, %p256
      %s259 = sadd.s32 %s258, 1
      %p262 = scmp.eq.s32.totalorder %s30, 1
      %p263 = scmp.ne.s32.totalorder %s258, %s260
      %p264 = scmp.eq.s32.totalorder %s30, 0
      %p265 = por %p263, %p264
      %p266 = scmp.ne.s32.totalorder %s258, %s260
      %p267 = scmp.eq.s32.totalorder %s35, 1
      %p268 = por %p266, %p267
      %p269 = scmp.ne.s32.totalorder %s260, %s261
      %p270 = scmp.eq.s32.totalorder %s35, 0
      %p271 = por %p269, %p270
      %p272 = scmp.ne.s32.totalorder %s260, %s261
      %p273 = scmp.eq.s32.totalorder %s36, 1
      %p274 = por %p272, %p273
      %p276 = scmp.ne.s32.totalorder %s261, %s275
      %p277 = scmp.eq.s32.totalorder %s36, 0
      %p278 = por %p276, %p277
      %s280 = sadd.s32 %s279, 1
      %p283 = scmp.eq.s32.totalorder %s30, 1
      %p284 = scmp.ne.s32.totalorder %s279, %s281
      %p285 = scmp.eq.s32.totalorder %s30, 0
      %p286 = por %p284, %p285
      %p287 = scmp.ne.s32.totalorder %s279, %s281
      %p288 = scmp.eq.s32.totalorder %s35, 1
      %p289 = por %p287, %p288
      %p290 = scmp.ne.s32.totalorder %s281, %s282
      %p291 = scmp.eq.s32.totalorder %s35, 0
      %p292 = por %p290, %p291
      %p293 = scmp.ne.s32.totalorder %s281, %s282
      %p294 = scmp.eq.s32.totalorder %s36, 1
      %p295 = por %p293, %p294
      %p297 = scmp.ne.s32.totalorder %s282, %s296
      %p298 = scmp.eq.s32.totalorder %s36, 0
      %p299 = por %p297, %p298
      %s301 = sadd.s32 %s300, 1
      %p304 = scmp.eq.s32.totalorder %s30, 1
      %p305 = scmp.ne.s32.totalorder %s300, %s302
      %p306 = scmp.eq.s32.totalorder %s30, 0
      %p307 = por %p305, %p306
      %p308 = scmp.ne.s32.totalorder %s300, %s302
      %p309 = scmp.eq.s32.totalorder %s35, 1
      %p310 = por %p308, %p309
      %p311 = scmp.ne.s32.totalorder %s302, %s303
      %p312 = scmp.eq.s32.totalorder %s35, 0
      %p313 = por %p311, %p312
      %p314 = scmp.ne.s32.totalorder %s302, %s303
      %p315 = scmp.eq.s32.totalorder %s36, 1
      %p316 = por %p314, %p315
      %p318 = scmp.ne.s32.totalorder %s303, %s317
      %p319 = scmp.eq.s32.totalorder %s36, 0
      %p320 = por %p318, %p319
      %s322 = sadd.s32 %s321, 1
      %p325 = scmp.eq.s32.totalorder %s30, 1
      %p326 = scmp.ne.s32.totalorder %s321, %s323
      %p327 = scmp.eq.s32.totalorder %s30, 0
      %p328 = por %p326, %p327
      %p329 = scmp.ne.s32.totalorder %s321, %s323
      %p330 = scmp.eq.s32.totalorder %s35, 1
      %p331 = por %p329, %p330
      %p332 = scmp.ne.s32.totalorder %s323, %s324
      %p333 = scmp.eq.s32.totalorder %s35, 0
      %p334 = por %p332, %p333
      %p335 = scmp.ne.s32.totalorder %s323, %s324
      %p336 = scmp.eq.s32.totalorder %s36, 1
      %p337 = por %p335, %p336
      %p339 = scmp.ne.s32.totalorder %s324, %s338
      %p340 = scmp.eq.s32.totalorder %s36, 0
      %p341 = por %p339, %p340
      %s342 = ssub.s32 %s30, %s37
      %p343 = scmp.eq.s32.totalorder %s342, 0
      %s345 = sadd.s32 %s344, 1
      %s346 = scalar_select %p343, %s344, %s345
      %p349 = pneg %p343
      %p350 = scmp.eq.s32.totalorder %s30, 1
      %p351 = por %p349, %p350
      %p352 = scmp.ne.s32.totalorder %s344, %s347
      %p353 = scmp.eq.s32.totalorder %s30, 0
      %p354 = por %p352, %p353
      %p355 = scmp.ne.s32.totalorder %s344, %s347
      %p356 = scmp.eq.s32.totalorder %s35, 1
      %p357 = por %p355, %p356
      %p358 = scmp.ne.s32.totalorder %s347, %s348
      %p359 = scmp.eq.s32.totalorder %s35, 0
      %p360 = por %p358, %p359
      %p361 = scmp.ne.s32.totalorder %s347, %s348
      %p362 = scmp.eq.s32.totalorder %s36, 1
      %p363 = por %p361, %p362
      %p365 = scmp.ne.s32.totalorder %s348, %s364
      %p366 = scmp.eq.s32.totalorder %s36, 0
      %p367 = por %p365, %p366
      %p368 = scmp.le.s32.totalorder 1, %s30
      %p369 = scmp.lt.s32.totalorder %s30, 3
      %p370 = pnand %p368, %p369
      %p371 = pneg %p370
      // Predicated region
      $region9: #{tpu_custom_call.1} parent=5 // pred_check
        _
      $region10: #{tpu_custom_call.1} parent=5 // pred_check_branch
        %373 = sbr.rel (%p370) target = $region12
      $region11: #{tpu_custom_call.1} parent=5 // pred_region
        %s374 = ssub.s32 %s30, 1
        // Predicated region
        $region13: #{tpu_custom_call.1} parent=11 // pred_check
          %p375 = pneg %p103
        $region14: #{tpu_custom_call.1} parent=11 // pred_check_branch
          %377 = sbr.rel (%p375) target = $region16
        $region15: #{tpu_custom_call.1} parent=11 // pred_region
          _
        $region16: #{tpu_custom_call.1} parent=11 // pred_fallthru
          _
        // Predicated region
        $region17: #{tpu_custom_call.1} parent=11 // pred_check
          %p378 = pneg %p124
        $region18: #{tpu_custom_call.1} parent=11 // pred_check_branch
          %380 = sbr.rel (%p378) target = $region20
        $region19: #{tpu_custom_call.1} parent=11 // pred_region
          _
        $region20: #{tpu_custom_call.1} parent=11 // pred_fallthru
          _
        // Predicated region
        $region21: #{tpu_custom_call.1} parent=11 // pred_check
          %p381 = pneg %p145
        $region22: #{tpu_custom_call.1} parent=11 // pred_check_branch
          %383 = sbr.rel (%p381) target = $region24
        $region23: #{tpu_custom_call.1} parent=11 // pred_region
          _
        $region24: #{tpu_custom_call.1} parent=11 // pred_fallthru
          _
        // Predicated region
        $region25: #{tpu_custom_call.1} parent=11 // pred_check
          %p384 = pneg %p166
        $region26: #{tpu_custom_call.1} parent=11 // pred_check_branch
          %386 = sbr.rel (%p384) target = $region28
        $region27: #{tpu_custom_call.1} parent=11 // pred_region
          _
        $region28: #{tpu_custom_call.1} parent=11 // pred_fallthru
          _
        // Predicated region
        $region29: #{tpu_custom_call.1} parent=11 // pred_check
          %p387 = pneg %p187
        $region30: #{tpu_custom_call.1} parent=11 // pred_check_branch
          %389 = sbr.rel (%p387) target = $region32
        $region31: #{tpu_custom_call.1} parent=11 // pred_region
          %s391 = ssub.s32 16, 16
          %392 = vsyncadd [#allocation6], %s391
          %s394 = sshll.u32 [#allocation7], 4
          %s395 = int_to_ptr.vmem [resolvable:$true] %s394
          %397 = dma.hbm_to_vmem [thread:$0]  %s6, 16, %s395, [#allocation6]
        $region32: #{tpu_custom_call.1} parent=11 // pred_fallthru
          _
        // Predicated region
        $region33: #{tpu_custom_call.1} parent=11 // pred_check
          %p398 = pneg %p208
        $region34: #{tpu_custom_call.1} parent=11 // pred_check_branch
          %400 = sbr.rel (%p398) target = $region36
        $region35: #{tpu_custom_call.1} parent=11 // pred_region
          %s402 = ssub.s32 16, 16
          %403 = vsyncadd [#allocation9], %s402
          %s405 = sshll.u32 [#allocation8], 4
          %s406 = int_to_ptr.vmem [resolvable:$true] %s405
          %408 = dma.hbm_to_vmem [thread:$0]  %s7, 16, %s406, [#allocation9]
        $region36: #{tpu_custom_call.1} parent=11 // pred_fallthru
          _
        // Predicated region
        $region37: #{tpu_custom_call.1} parent=11 // pred_check
          %p409 = pneg %p229
        $region38: #{tpu_custom_call.1} parent=11 // pred_check_branch
          %411 = sbr.rel (%p409) target = $region40
        $region39: #{tpu_custom_call.1} parent=11 // pred_region
          _
        $region40: #{tpu_custom_call.1} parent=11 // pred_fallthru
          _
        // Predicated region
        $region41: #{tpu_custom_call.1} parent=11 // pred_check
          %p412 = pneg %p250
        $region42: #{tpu_custom_call.1} parent=11 // pred_check_branch
          %414 = sbr.rel (%p412) target = $region44
        $region43: #{tpu_custom_call.1} parent=11 // pred_region
          %s416 = ssub.s32 16, 16
          %417 = vsyncadd [#allocation9], %s416
          %s419 = sshll.u32 [#allocation10], 4
          %s420 = int_to_ptr.vmem [resolvable:$true] %s419
          %422 = dma.hbm_to_vmem [thread:$0]  %s9, 16, %s420, [#allocation9]
        $region44: #{tpu_custom_call.1} parent=11 // pred_fallthru
          _
        // Predicated region
        $region45: #{tpu_custom_call.1} parent=11 // pred_check
          %p423 = pneg %p271
        $region46: #{tpu_custom_call.1} parent=11 // pred_check_branch
          %425 = sbr.rel (%p423) target = $region48
        $region47: #{tpu_custom_call.1} parent=11 // pred_region
          _
        $region48: #{tpu_custom_call.1} parent=11 // pred_fallthru
          _
        // Predicated region
        $region49: #{tpu_custom_call.1} parent=11 // pred_check
          %p426 = pneg %p292
        $region50: #{tpu_custom_call.1} parent=11 // pred_check_branch
          %428 = sbr.rel (%p426) target = $region52
        $region51: #{tpu_custom_call.1} parent=11 // pred_region
          _
        $region52: #{tpu_custom_call.1} parent=11 // pred_fallthru
          _
        // Predicated region
        $region53: #{tpu_custom_call.1} parent=11 // pred_check
          %p429 = pneg %p313
        $region54: #{tpu_custom_call.1} parent=11 // pred_check_branch
          %431 = sbr.rel (%p429) target = $region56
        $region55: #{tpu_custom_call.1} parent=11 // pred_region
          _
        $region56: #{tpu_custom_call.1} parent=11 // pred_fallthru
          _
        // Predicated region
        $region57: #{tpu_custom_call.1} parent=11 // pred_check
          %p432 = pneg %p334
        $region58: #{tpu_custom_call.1} parent=11 // pred_check_branch
          %434 = sbr.rel (%p432) target = $region60
        $region59: #{tpu_custom_call.1} parent=11 // pred_region
          _
        $region60: #{tpu_custom_call.1} parent=11 // pred_fallthru
          _
      $region12: #{tpu_custom_call.1} parent=5 // pred_fallthru
        _
      %p435 = scmp.lt.s32.totalorder %s30, 2
      // Predicated region
      $region61: #{tpu_custom_call.1} parent=5 // pred_check
        %p436 = pneg %p435
      $region62: #{tpu_custom_call.1} parent=5 // pred_check_branch
        %438 = sbr.rel (%p436) target = $region64
      $region63: #{tpu_custom_call.1} parent=5 // pred_region
        // Predicated region
        $region65: #{tpu_custom_call.1} parent=63 // pred_check
          %p439 = pneg %p50
        $region66: #{tpu_custom_call.1} parent=63 // pred_check_branch
          %441 = sbr.rel (%p439) target = $region68
        $region67: #{tpu_custom_call.1} parent=63 // pred_region
          %s442 = sand.u32 %s40, 1
          %s443 = scalar_lea.sflag [#allocation3], %s442
          %s444 = sand.u32 %s40, 1
          %s445 = smul.addr %s444, 4
          %s446 = scalar_lea.vmem [#allocation2], %s445
          %s448 = ssub.s32 64, 64
          %449 = vsyncadd %s443, %s448
          %s450 = smul.addr %s30, 64
          %s451 = scalar_lea.hbm %s0, %s450
          %s453 = sshll.u32 %s446, 4
          %s454 = int_to_ptr.vmem [resolvable:$true] %s453
          %456 = dma.hbm_to_vmem [thread:$0]  %s451, 64, %s454, %s443
        $region68: #{tpu_custom_call.1} parent=63 // pred_fallthru
          _
        // Predicated region
        $region69: #{tpu_custom_call.1} parent=63 // pred_check
          %p457 = pneg %p76
        $region70: #{tpu_custom_call.1} parent=63 // pred_check_branch
          %459 = sbr.rel (%p457) target = $region72
        $region71: #{tpu_custom_call.1} parent=63 // pred_region
          %s460 = sand.u32 %s30, 1
          %s461 = scalar_lea.sflag [#allocation6], %s460
          %s462 = sand.u32 %s66, 1
          %s463 = scalar_lea.vmem [#allocation5], %s462
          %s465 = ssub.s32 16, 16
          %466 = vsyncadd %s461, %s465
          %s467 = smul.addr %s30, 16
          %s468 = scalar_lea.hbm %s1, %s467
          %s470 = sshll.u32 %s463, 4
          %s471 = int_to_ptr.vmem [resolvable:$true] %s470
          %473 = dma.hbm_to_vmem [thread:$0]  %s468, 16, %s471, %s461
        $region72: #{tpu_custom_call.1} parent=63 // pred_fallthru
          _
      $region64: #{tpu_custom_call.1} parent=5 // pred_fallthru
        _
      %p474 = scmp.le.s32.totalorder 1, %s30
      %p475 = scmp.lt.s32.totalorder %s30, 3
      %p476 = pnand %p474, %p475
      %p477 = pneg %p476
      // Predicated region
      $region73: #{tpu_custom_call.1} parent=5 // pred_check
        _
      $region74: #{tpu_custom_call.1} parent=5 // pred_check_branch
        %479 = sbr.rel (%p476) target = $region76
      $region75: #{tpu_custom_call.1} parent=5 // pred_region
        %s480 = ssub.s32 %s30, 1
        %s481 = sand.u32 %s43, 1
        %s482 = scalar_lea.sflag [#allocation3], %s481
        %s483 = sand.u32 %s43, 1
        %s484 = smul.addr %s483, 4
        %s485 = scalar_lea.vmem [#allocation2], %s484
        // Predicated region
        $region77: #{tpu_custom_call.1} parent=75 // pred_check
          %p486 = pneg %p56
        $region78: #{tpu_custom_call.1} parent=75 // pred_check_branch
          %488 = sbr.rel (%p486) target = $region80
        $region79: #{tpu_custom_call.1} parent=75 // pred_region
          %489 = dma.done %s482, 64
        $region80: #{tpu_custom_call.1} parent=75 // pred_fallthru
          _
        %s490 = sand.u32 %s35, 1
        %s491 = scalar_lea.sflag [#allocation6], %s490
        %s492 = sand.u32 %s69, 1
        %s493 = scalar_lea.vmem [#allocation5], %s492
        // Predicated region
        $region81: #{tpu_custom_call.1} parent=75 // pred_check
          %p494 = pneg %p82
        $region82: #{tpu_custom_call.1} parent=75 // pred_check_branch
          %496 = sbr.rel (%p494) target = $region84
        $region83: #{tpu_custom_call.1} parent=75 // pred_region
          %497 = dma.done %s491, 16
        $region84: #{tpu_custom_call.1} parent=75 // pred_fallthru
          _
        // Predicated region
        $region85: #{tpu_custom_call.1} parent=75 // pred_check
          %p498 = pneg %p187
        $region86: #{tpu_custom_call.1} parent=75 // pred_check_branch
          %500 = sbr.rel (%p498) target = $region88
        $region87: #{tpu_custom_call.1} parent=75 // pred_region
          %501 = dma.done [#allocation6], 16
        $region88: #{tpu_custom_call.1} parent=75 // pred_fallthru
          _
        // Predicated region
        $region89: #{tpu_custom_call.1} parent=75 // pred_check
          %p502 = pneg %p208
        $region90: #{tpu_custom_call.1} parent=75 // pred_check_branch
          %504 = sbr.rel (%p502) target = $region92
        $region91: #{tpu_custom_call.1} parent=75 // pred_region
          %505 = dma.done [#allocation9], 16
        $region92: #{tpu_custom_call.1} parent=75 // pred_fallthru
          _
        // Predicated region
        $region93: #{tpu_custom_call.1} parent=75 // pred_check
          %p506 = pneg %p250
        $region94: #{tpu_custom_call.1} parent=75 // pred_check_branch
          %508 = sbr.rel (%p506) target = $region96
        $region95: #{tpu_custom_call.1} parent=75 // pred_region
          %509 = dma.done [#allocation9], 16
        $region96: #{tpu_custom_call.1} parent=75 // pred_fallthru
          _
        %s510 = sand.u32 %s43, 1
        %s511 = scalar_lea.sflag [#allocation3], %s510
        %s512 = sand.u32 %s43, 1
        %s513 = smul.addr %s512, 4
        %s514 = scalar_lea.vmem [#allocation2], %s513
        %p515 = pneg %p56
        %p516 = pneg %p53
        %s517 = sand.u32 %s35, 1
        %s518 = scalar_lea.sflag [#allocation6], %s517
        %s519 = sand.u32 %s69, 1
        %s520 = scalar_lea.vmem [#allocation5], %s519
        %p521 = pneg %p82
        %p522 = pneg %p79
        %p523 = pneg %p103
        %p524 = pneg %p100
        %p525 = pneg %p124
        %p526 = pneg %p121
        %p527 = pneg %p145
        %p528 = pneg %p142
        %p529 = pneg %p166
        %p530 = pneg %p163
        %p531 = pneg %p187
        %p532 = pneg %p184
        %p533 = pneg %p208
        %p534 = pneg %p205
        %p535 = pneg %p229
        %p536 = pneg %p226
        %p537 = pneg %p250
        %p538 = pneg %p247
        %p539 = pneg %p271
        %p540 = pneg %p268
        %p541 = pneg %p292
        %p542 = pneg %p289
        %p543 = pneg %p313
        %p544 = pneg %p310
        %p545 = pneg %p334
        %p546 = pneg %p331
        %p547 = pneg %p360
        %p548 = pneg %p357
        %s549 = sand.u32 %s347, 1
        %s550 = scalar_lea.sflag [#allocation4], %s549
        %s551 = sand.u32 %s347, 1
        %s552 = smul.addr %s551, 4
        %s553 = scalar_lea.vmem [#allocation11], %s552
        %v555 = vld [vmem:[%s485] sm:$0xf]
        %v556 = vunpack.c.l.bf16 %v555
        %v557 = vld [vmem:[%s2] sm:$0xf]
        %v558 = vld [vmem:[%s2 + $0x4] sm:$0xf]
        %v559 = vld [vmem:[%s2 + $0x8] sm:$0xf]
        %v560 = vld [vmem:[%s2 + $0xc] sm:$0xf]
        %v561 = vld [vmem:[%s3] sm:$0x1]
        %v563 = vlaneseq
        %v564 = vshrl.u32 %v563, 7
        %v565 = vsub.s32 0, %v564
        %v566 = vrot.slane %v561, %v565
        %v572 = vunpack.c.l.b16 %v557
        %v573 = vunpack.c.l.b16 %v558
        %v574 = vunpack.c.l.b16 %v559
        %v575 = vunpack.c.l.b16 %v560
        %v576 = vpack.c.b16 %v573, %v572
        %v577 = vpack.c.b16 %v575, %v574
        %vm580 = vcmask 261120
        %v582 = vsel %vm580, %v555, 0
        %584 = vmatprep.subr.bf16.mxu0 0
        %585 = vmatpush1.bf16.msra.mxu0 0
        %586 = vmatprep.subr.bf16.mxu0 0
        %587 = vmatpush1.bf16.msra.mxu0 0
        %588 = vmatprep.subr.bf16.mxu0 0
        %589 = vmatpush1.bf16.msra.mxu0 0
        %590 = vmatprep.subr.bf16.mxu0 0
        %591 = vmatpush1.bf16.msra.mxu0 0
        %592 = vmatprep.subr.bf16.mxu0 0
        %593 = vmatpush1.bf16.msra.mxu0 0
        %594 = vmatprep.subr.bf16.mxu0 0
        %595 = vmatpush1.bf16.msra.mxu0 0
        %596 = vmatprep.subr.bf16.mxu0 0
        %597 = vmatpush1.bf16.msra.mxu0 %v577
        %598 = vmatprep.subr.bf16.mxu0 0
        %599 = vmatpush1.bf16.msra.mxu0 %v576
        %600 = vmatprep.subr.bf16.mxu0 0
        %601 = vmatpush2.bf16.msra.mxu0 0
        %602 = vmatprep.subr.bf16.mxu0 0
        %603 = vmatpush2.bf16.msra.mxu0 0
        %604 = vmatprep.subr.bf16.mxu0 0
        %605 = vmatpush2.bf16.msra.mxu0 0
        %606 = vmatprep.subr.bf16.mxu0 0
        %607 = vmatpush2.bf16.msra.mxu0 0
        %608 = vmatprep.subr.bf16.mxu0 0
        %609 = vmatpush2.bf16.msra.mxu0 0
        %610 = vmatprep.subr.bf16.mxu0 0
        %611 = vmatpush2.bf16.msra.mxu0 0
        %612 = vmatprep.subr.bf16.mxu0 0
        %613 = vmatpush2.bf16.msra.mxu0 0
        %614 = vmatprep.subr.bf16.mxu0 0
        %615 = vmatpush2.bf16.msra.mxu0 0
        %616 = vmatprep.mubr.bf16.mxu0 0
        %617 = vmatmul.mubr.bf16.gmra.mxu0 %v582
        %v618 = vpop.f32.mrf.mxu0
        %v619 = vadd.f32 %v566, %v618
        %v620 = vpop.f32.mrf.mxu0
        %v621 = vpop.f32.mrf.mxu0
        %v622 = vpop.f32.mrf.mxu0
        %623 = vdwg.mxu0
        %v624 = vpack.c.bf16 %v619, %v619
        %v625 = vld [vmem:[%s493] sm:$0x1]
        %v627 = vlaneseq
        %v628 = vshrl.u32 %v627, 7
        %v629 = vsub.s32 0, %v628
        %v630 = vrot.slane %v625, %v629
        %633 = vrot.lane.b32.xlu0 %v624, 96
        %v634 = vpop.permute.xlu0 %633
        %vm635 = vcmask 64512
        %v637 = vsel %vm635, %v624, 0
        %v640 = vsel %vm635, %v634, 0
        %642 = vmatprep.subr.bf16.mxu0 0
        %643 = vmatpush1.bf16.xpose.msra.mxu0 0
        %644 = vmatprep.subr.bf16.mxu0 0
        %645 = vmatpush1.bf16.xpose.msra.mxu0 0
        %646 = vmatprep.subr.bf16.mxu0 0
        %647 = vmatpush1.bf16.xpose.msra.mxu0 0
        %648 = vmatprep.subr.bf16.mxu0 0
        %649 = vmatpush1.bf16.xpose.msra.mxu0 0
        %650 = vmatprep.subr.bf16.mxu0 0
        %651 = vmatpush1.bf16.xpose.msra.mxu0 0
        %652 = vmatprep.subr.bf16.mxu0 0
        %653 = vmatpush1.bf16.xpose.msra.mxu0 0
        %654 = vmatprep.subr.bf16.mxu0 0
        %655 = vmatpush1.bf16.xpose.msra.mxu0 0
        %656 = vmatprep.subr.bf16.mxu0 0
        %657 = vmatpush1.bf16.xpose.msra.mxu0 %v640
        %658 = vmatprep.subr.bf16.mxu0 0
        %659 = vmatpush2.bf16.xpose.msra.mxu0 0
        %660 = vmatprep.subr.bf16.mxu0 0
        %661 = vmatpush2.bf16.xpose.msra.mxu0 0
        %662 = vmatprep.subr.bf16.mxu0 0
        %663 = vmatpush2.bf16.xpose.msra.mxu0 0
        %664 = vmatprep.subr.bf16.mxu0 0
        %665 = vmatpush2.bf16.xpose.msra.mxu0 0
        %666 = vmatprep.subr.bf16.mxu0 0
        %667 = vmatpush2.bf16.xpose.msra.mxu0 0
        %668 = vmatprep.subr.bf16.mxu0 0
        %669 = vmatpush2.bf16.xpose.msra.mxu0 0
        %670 = vmatprep.subr.bf16.mxu0 0
        %671 = vmatpush2.bf16.xpose.msra.mxu0 0
        %672 = vmatprep.subr.bf16.mxu0 0
        %673 = vmatpush2.bf16.xpose.msra.mxu0 0
        %674 = vmatprep.mubr.bf16.mxu0 0
        %675 = vmatmul.mubr.bf16.gmra.mxu0 %v637
        %v676 = vpop.f32.mrf.mxu0
        %v677 = vadd.f32 0.0, %v676
        %v678 = vpop.f32.mrf.mxu0
        %v679 = vpop.f32.mrf.mxu0
        %v680 = vpop.f32.mrf.mxu0
        %681 = vdwg.mxu0
        %v682 = vmul.f32 %v677, 0.35355338
        %v683 = vadd.f32 %v682, %v630
        %v684 = vsel %vm635, %v683, -inf
        %685 = vmax.xlane.f32.xlu0 %v684
        %v686 = vpop.xlane.xlu0 %685
        %v687 = vsub.f32 %v683, %v686
        %v688 = vmul.f32 %v687, 1.442695
        %v689 = vpow.pop %v688
        %v690 = vsel %vm635, %v689, 0.0
        %691 = vadd.xlane.f32.xlu0 %v690
        %v692 = vpop.xlane.xlu0 %691
        %v693 = vrcp.pop %v692
        %v694 = vmul.f32 %v689, %v693
        %v695 = vpack.c.bf16 %v694, %v694
        %696 = vrot.lane.b32.xlu0 %v624, 64
        %v697 = vpop.permute.xlu0 %696
        %v699 = vsel %vm635, %v695, 0
        %vm701 = vcmask 1043456
        %v703 = vsel %vm701, %v697, 0
        %705 = vmatprep.subr.bf16.mxu0 0
        %706 = vmatpush1.bf16.msra.mxu0 0
        %707 = vmatprep.subr.bf16.mxu0 0
        %708 = vmatpush1.bf16.msra.mxu0 0
        %709 = vmatprep.subr.bf16.mxu0 0
        %710 = vmatpush1.bf16.msra.mxu0 0
        %711 = vmatprep.subr.bf16.mxu0 0
        %712 = vmatpush1.bf16.msra.mxu0 0
        %713 = vmatprep.subr.bf16.mxu0 0
        %714 = vmatpush1.bf16.msra.mxu0 0
        %715 = vmatprep.subr.bf16.mxu0 0
        %716 = vmatpush1.bf16.msra.mxu0 0
        %717 = vmatprep.subr.bf16.mxu0 0
        %718 = vmatpush1.bf16.msra.mxu0 0
        %719 = vmatprep.subr.bf16.mxu0 0
        %720 = vmatpush1.bf16.msra.mxu0 %v703
        %721 = vmatprep.subr.bf16.mxu0 0
        %722 = vmatpush2.bf16.msra.mxu0 0
        %723 = vmatprep.subr.bf16.mxu0 0
        %724 = vmatpush2.bf16.msra.mxu0 0
        %725 = vmatprep.subr.bf16.mxu0 0
        %726 = vmatpush2.bf16.msra.mxu0 0
        %727 = vmatprep.subr.bf16.mxu0 0
        %728 = vmatpush2.bf16.msra.mxu0 0
        %729 = vmatprep.subr.bf16.mxu0 0
        %730 = vmatpush2.bf16.msra.mxu0 0
        %731 = vmatprep.subr.bf16.mxu0 0
        %732 = vmatpush2.bf16.msra.mxu0 0
        %733 = vmatprep.subr.bf16.mxu0 0
        %734 = vmatpush2.bf16.msra.mxu0 0
        %735 = vmatprep.subr.bf16.mxu0 0
        %736 = vmatpush2.bf16.msra.mxu0 0
        %737 = vmatprep.mubr.bf16.mxu0 0
        %738 = vmatmul.mubr.bf16.gmra.mxu0 %v699
        %v739 = vpop.f32.mrf.mxu0
        %v740 = vadd.f32 0.0, %v739
        %v741 = vpop.f32.mrf.mxu0
        %v742 = vpop.f32.mrf.mxu0
        %v743 = vpop.f32.mrf.mxu0
        %744 = vdwg.mxu0
        %v745 = vpack.c.bf16 %v740, %v740
        %v746 = vld [vmem:[%s4] sm:$0xf]
        %747 = vrot.lane.b32.xlu0 %v624, 120
        %v748 = vpop.permute.xlu0 %747
        %749 = vrot.lane.b32.xlu0 %v624, 88
        %v750 = vpop.permute.xlu0 %749
        %v752 = vsel %vm635, %v748, 0
        %v755 = vsel %vm635, %v750, 0
        %757 = vmatprep.subr.bf16.mxu0 0
        %758 = vmatpush1.bf16.xpose.msra.mxu0 0
        %759 = vmatprep.subr.bf16.mxu0 0
        %760 = vmatpush1.bf16.xpose.msra.mxu0 0
        %761 = vmatprep.subr.bf16.mxu0 0
        %762 = vmatpush1.bf16.xpose.msra.mxu0 0
        %763 = vmatprep.subr.bf16.mxu0 0
        %764 = vmatpush1.bf16.xpose.msra.mxu0 0
        %765 = vmatprep.subr.bf16.mxu0 0
        %766 = vmatpush1.bf16.xpose.msra.mxu0 0
        %767 = vmatprep.subr.bf16.mxu0 0
        %768 = vmatpush1.bf16.xpose.msra.mxu0 0
        %769 = vmatprep.subr.bf16.mxu0 0
        %770 = vmatpush1.bf16.xpose.msra.mxu0 0
        %771 = vmatprep.subr.bf16.mxu0 0
        %772 = vmatpush1.bf16.xpose.msra.mxu0 %v755
        %773 = vmatprep.subr.bf16.mxu0 0
        %774 = vmatpush2.bf16.xpose.msra.mxu0 0
        %775 = vmatprep.subr.bf16.mxu0 0
        %776 = vmatpush2.bf16.xpose.msra.mxu0 0
        %777 = vmatprep.subr.bf16.mxu0 0
        %778 = vmatpush2.bf16.xpose.msra.mxu0 0
        %779 = vmatprep.subr.bf16.mxu0 0
        %780 = vmatpush2.bf16.xpose.msra.mxu0 0
        %781 = vmatprep.subr.bf16.mxu0 0
        %782 = vmatpush2.bf16.xpose.msra.mxu0 0
        %783 = vmatprep.subr.bf16.mxu0 0
        %784 = vmatpush2.bf16.xpose.msra.mxu0 0
        %785 = vmatprep.subr.bf16.mxu0 0
        %786 = vmatpush2.bf16.xpose.msra.mxu0 0
        %787 = vmatprep.subr.bf16.mxu0 0
        %788 = vmatpush2.bf16.xpose.msra.mxu0 0
        %789 = vmatprep.mubr.bf16.mxu0 0
        %790 = vmatmul.mubr.bf16.gmra.mxu0 %v752
        %v791 = vpop.f32.mrf.mxu0
        %v792 = vadd.f32 0.0, %v791
        %v793 = vpop.f32.mrf.mxu0
        %v794 = vpop.f32.mrf.mxu0
        %v795 = vpop.f32.mrf.mxu0
        %796 = vdwg.mxu0
        %v797 = vmul.f32 %v792, 0.35355338
        %v798 = vadd.f32 %v797, %v630
        %v799 = vsel %vm635, %v798, -inf
        %800 = vmax.xlane.f32.xlu0 %v799
        %v801 = vpop.xlane.xlu0 %800
        %v802 = vsub.f32 %v798, %v801
        %v803 = vmul.f32 %v802, 1.442695
        %v804 = vpow.pop %v803
        %v805 = vsel %vm635, %v804, 0.0
        %806 = vadd.xlane.f32.xlu0 %v805
        %v807 = vpop.xlane.xlu0 %806
        %v808 = vrcp.pop %v807
        %v809 = vmul.f32 %v804, %v808
        %v810 = vpack.c.bf16 %v809, %v809
        %811 = vrot.lane.b32.xlu0 %v624, 56
        %v812 = vpop.permute.xlu0 %811
        %v814 = vsel %vm635, %v810, 0
        %v817 = vsel %vm701, %v812, 0
        %819 = vmatprep.subr.bf16.mxu0 0
        %820 = vmatpush1.bf16.msra.mxu0 0
        %821 = vmatprep.subr.bf16.mxu0 0
        %822 = vmatpush1.bf16.msra.mxu0 0
        %823 = vmatprep.subr.bf16.mxu0 0
        %824 = vmatpush1.bf16.msra.mxu0 0
        %825 = vmatprep.subr.bf16.mxu0 0
        %826 = vmatpush1.bf16.msra.mxu0 0
        %827 = vmatprep.subr.bf16.mxu0 0
        %828 = vmatpush1.bf16.msra.mxu0 0
        %829 = vmatprep.subr.bf16.mxu0 0
        %830 = vmatpush1.bf16.msra.mxu0 0
        %831 = vmatprep.subr.bf16.mxu0 0
        %832 = vmatpush1.bf16.msra.mxu0 0
        %833 = vmatprep.subr.bf16.mxu0 0
        %834 = vmatpush1.bf16.msra.mxu0 %v817
        %835 = vmatprep.subr.bf16.mxu0 0
        %836 = vmatpush2.bf16.msra.mxu0 0
        %837 = vmatprep.subr.bf16.mxu0 0
        %838 = vmatpush2.bf16.msra.mxu0 0
        %839 = vmatprep.subr.bf16.mxu0 0
        %840 = vmatpush2.bf16.msra.mxu0 0
        %841 = vmatprep.subr.bf16.mxu0 0
        %842 = vmatpush2.bf16.msra.mxu0 0
        %843 = vmatprep.subr.bf16.mxu0 0
        %844 = vmatpush2.bf16.msra.mxu0 0
        %845 = vmatprep.subr.bf16.mxu0 0
        %846 = vmatpush2.bf16.msra.mxu0 0
        %847 = vmatprep.subr.bf16.mxu0 0
        %848 = vmatpush2.bf16.msra.mxu0 0
        %849 = vmatprep.subr.bf16.mxu0 0
        %850 = vmatpush2.bf16.msra.mxu0 0
        %851 = vmatprep.mubr.bf16.mxu0 0
        %852 = vmatmul.mubr.bf16.gmra.mxu0 %v814
        %v853 = vpop.f32.mrf.mxu0
        %v854 = vadd.f32 0.0, %v853
        %v855 = vpop.f32.mrf.mxu0
        %v856 = vpop.f32.mrf.mxu0
        %v857 = vpop.f32.mrf.mxu0
        %858 = vdwg.mxu0
        %v859 = vpack.c.bf16 %v854, %v854
        %s860 = scalar_lea.vmem %s4, 4
        %v861 = vld [vmem:[%s860] sm:$0xf]
        %v863 = vsel %vm635, %v859, 0
        %v866 = vsel %vm701, %v861, 0
        %868 = vmatprep.subr.bf16.mxu0 0
        %869 = vmatpush1.bf16.msra.mxu0 0
        %870 = vmatprep.subr.bf16.mxu0 0
        %871 = vmatpush1.bf16.msra.mxu0 0
        %872 = vmatprep.subr.bf16.mxu0 0
        %873 = vmatpush1.bf16.msra.mxu0 0
        %874 = vmatprep.subr.bf16.mxu0 0
        %875 = vmatpush1.bf16.msra.mxu0 0
        %876 = vmatprep.subr.bf16.mxu0 0
        %877 = vmatpush1.bf16.msra.mxu0 0
        %878 = vmatprep.subr.bf16.mxu0 0
        %879 = vmatpush1.bf16.msra.mxu0 0
        %880 = vmatprep.subr.bf16.mxu0 0
        %881 = vmatpush1.bf16.msra.mxu0 0
        %882 = vmatprep.subr.bf16.mxu0 0
        %883 = vmatpush1.bf16.msra.mxu0 %v866
        %884 = vmatprep.subr.bf16.mxu0 0
        %885 = vmatpush2.bf16.msra.mxu0 0
        %886 = vmatprep.subr.bf16.mxu0 0
        %887 = vmatpush2.bf16.msra.mxu0 0
        %888 = vmatprep.subr.bf16.mxu0 0
        %889 = vmatpush2.bf16.msra.mxu0 0
        %890 = vmatprep.subr.bf16.mxu0 0
        %891 = vmatpush2.bf16.msra.mxu0 0
        %892 = vmatprep.subr.bf16.mxu0 0
        %893 = vmatpush2.bf16.msra.mxu0 0
        %894 = vmatprep.subr.bf16.mxu0 0
        %895 = vmatpush2.bf16.msra.mxu0 0
        %896 = vmatprep.subr.bf16.mxu0 0
        %897 = vmatpush2.bf16.msra.mxu0 0
        %898 = vmatprep.subr.bf16.mxu0 0
        %899 = vmatpush2.bf16.msra.mxu0 0
        %900 = vmatprep.mubr.bf16.mxu0 0
        %901 = vmatmul.mubr.bf16.gmra.mxu0 %v863
        %v902 = vpop.f32.mrf.mxu0
        %v903 = vadd.f32 0.0, %v902
        %v904 = vpop.f32.mrf.mxu0
        %v905 = vpop.f32.mrf.mxu0
        %v906 = vpop.f32.mrf.mxu0
        %907 = vdwg.mxu0
        %v909 = vsel %vm635, %v745, 0
        %v912 = vsel %vm701, %v746, 0
        %914 = vmatprep.subr.bf16.mxu0 0
        %915 = vmatpush1.bf16.msra.mxu0 0
        %916 = vmatprep.subr.bf16.mxu0 0
        %917 = vmatpush1.bf16.msra.mxu0 0
        %918 = vmatprep.subr.bf16.mxu0 0
        %919 = vmatpush1.bf16.msra.mxu0 0
        %920 = vmatprep.subr.bf16.mxu0 0
        %921 = vmatpush1.bf16.msra.mxu0 0
        %922 = vmatprep.subr.bf16.mxu0 0
        %923 = vmatpush1.bf16.msra.mxu0 0
        %924 = vmatprep.subr.bf16.mxu0 0
        %925 = vmatpush1.bf16.msra.mxu0 0
        %926 = vmatprep.subr.bf16.mxu0 0
        %927 = vmatpush1.bf16.msra.mxu0 0
        %928 = vmatprep.subr.bf16.mxu0 0
        %929 = vmatpush1.bf16.msra.mxu0 %v912
        %930 = vmatprep.subr.bf16.mxu0 0
        %931 = vmatpush2.bf16.msra.mxu0 0
        %932 = vmatprep.subr.bf16.mxu0 0
        %933 = vmatpush2.bf16.msra.mxu0 0
        %934 = vmatprep.subr.bf16.mxu0 0
        %935 = vmatpush2.bf16.msra.mxu0 0
        %936 = vmatprep.subr.bf16.mxu0 0
        %937 = vmatpush2.bf16.msra.mxu0 0
        %938 = vmatprep.subr.bf16.mxu0 0
        %939 = vmatpush2.bf16.msra.mxu0 0
        %940 = vmatprep.subr.bf16.mxu0 0
        %941 = vmatpush2.bf16.msra.mxu0 0
        %942 = vmatprep.subr.bf16.mxu0 0
        %943 = vmatpush2.bf16.msra.mxu0 0
        %944 = vmatprep.subr.bf16.mxu0 0
        %945 = vmatpush2.bf16.msra.mxu0 0
        %946 = vmatprep.mubr.bf16.mxu0 0
        %947 = vmatmul.mubr.bf16.gmra.mxu0 %v909
        %v948 = vpop.f32.mrf.mxu0
        %v949 = vadd.f32 %v903, %v948
        %v950 = vpop.f32.mrf.mxu0
        %v951 = vpop.f32.mrf.mxu0
        %v952 = vpop.f32.mrf.mxu0
        %953 = vdwg.mxu0
        %954 = vrot.lane.b32.xlu0 %v624, 112
        %v955 = vpop.permute.xlu0 %954
        %956 = vrot.lane.b32.xlu0 %v624, 80
        %v957 = vpop.permute.xlu0 %956
        %v959 = vsel %vm635, %v955, 0
        %v962 = vsel %vm635, %v957, 0
        %964 = vmatprep.subr.bf16.mxu0 0
        %965 = vmatpush1.bf16.xpose.msra.mxu0 0
        %966 = vmatprep.subr.bf16.mxu0 0
        %967 = vmatpush1.bf16.xpose.msra.mxu0 0
        %968 = vmatprep.subr.bf16.mxu0 0
        %969 = vmatpush1.bf16.xpose.msra.mxu0 0
        %970 = vmatprep.subr.bf16.mxu0 0
        %971 = vmatpush1.bf16.xpose.msra.mxu0 0
        %972 = vmatprep.subr.bf16.mxu0 0
        %973 = vmatpush1.bf16.xpose.msra.mxu0 0
        %974 = vmatprep.subr.bf16.mxu0 0
        %975 = vmatpush1.bf16.xpose.msra.mxu0 0
        %976 = vmatprep.subr.bf16.mxu0 0
        %977 = vmatpush1.bf16.xpose.msra.mxu0 0
        %978 = vmatprep.subr.bf16.mxu0 0
        %979 = vmatpush1.bf16.xpose.msra.mxu0 %v962
        %980 = vmatprep.subr.bf16.mxu0 0
        %981 = vmatpush2.bf16.xpose.msra.mxu0 0
        %982 = vmatprep.subr.bf16.mxu0 0
        %983 = vmatpush2.bf16.xpose.msra.mxu0 0
        %984 = vmatprep.subr.bf16.mxu0 0
        %985 = vmatpush2.bf16.xpose.msra.mxu0 0
        %986 = vmatprep.subr.bf16.mxu0 0
        %987 = vmatpush2.bf16.xpose.msra.mxu0 0
        %988 = vmatprep.subr.bf16.mxu0 0
        %989 = vmatpush2.bf16.xpose.msra.mxu0 0
        %990 = vmatprep.subr.bf16.mxu0 0
        %991 = vmatpush2.bf16.xpose.msra.mxu0 0
        %992 = vmatprep.subr.bf16.mxu0 0
        %993 = vmatpush2.bf16.xpose.msra.mxu0 0
        %994 = vmatprep.subr.bf16.mxu0 0
        %995 = vmatpush2.bf16.xpose.msra.mxu0 0
        %996 = vmatprep.mubr.bf16.mxu0 0
        %997 = vmatmul.mubr.bf16.gmra.mxu0 %v959
        %v998 = vpop.f32.mrf.mxu0
        %v999 = vadd.f32 0.0, %v998
        %v1000 = vpop.f32.mrf.mxu0
        %v1001 = vpop.f32.mrf.mxu0
        %v1002 = vpop.f32.mrf.mxu0
        %1003 = vdwg.mxu0
        %v1004 = vmul.f32 %v999, 0.35355338
        %v1005 = vadd.f32 %v1004, %v630
        %v1006 = vsel %vm635, %v1005, -inf
        %1007 = vmax.xlane.f32.xlu0 %v1006
        %v1008 = vpop.xlane.xlu0 %1007
        %v1009 = vsub.f32 %v1005, %v1008
        %v1010 = vmul.f32 %v1009, 1.442695
        %v1011 = vpow.pop %v1010
        %v1012 = vsel %vm635, %v1011, 0.0
        %1013 = vadd.xlane.f32.xlu0 %v1012
        %v1014 = vpop.xlane.xlu0 %1013
        %v1015 = vrcp.pop %v1014
        %v1016 = vmul.f32 %v1011, %v1015
        %v1017 = vpack.c.bf16 %v1016, %v1016
        %1018 = vrot.lane.b32.xlu0 %v624, 48
        %v1019 = vpop.permute.xlu0 %1018
        %v1021 = vsel %vm635, %v1017, 0
        %v1024 = vsel %vm701, %v1019, 0
        %1026 = vmatprep.subr.bf16.mxu0 0
        %1027 = vmatpush1.bf16.msra.mxu0 0
        %1028 = vmatprep.subr.bf16.mxu0 0
        %1029 = vmatpush1.bf16.msra.mxu0 0
        %1030 = vmatprep.subr.bf16.mxu0 0
        %1031 = vmatpush1.bf16.msra.mxu0 0
        %1032 = vmatprep.subr.bf16.mxu0 0
        %1033 = vmatpush1.bf16.msra.mxu0 0
        %1034 = vmatprep.subr.bf16.mxu0 0
        %1035 = vmatpush1.bf16.msra.mxu0 0
        %1036 = vmatprep.subr.bf16.mxu0 0
        %1037 = vmatpush1.bf16.msra.mxu0 0
        %1038 = vmatprep.subr.bf16.mxu0 0
        %1039 = vmatpush1.bf16.msra.mxu0 0
        %1040 = vmatprep.subr.bf16.mxu0 0
        %1041 = vmatpush1.bf16.msra.mxu0 %v1024
        %1042 = vmatprep.subr.bf16.mxu0 0
        %1043 = vmatpush2.bf16.msra.mxu0 0
        %1044 = vmatprep.subr.bf16.mxu0 0
        %1045 = vmatpush2.bf16.msra.mxu0 0
        %1046 = vmatprep.subr.bf16.mxu0 0
        %1047 = vmatpush2.bf16.msra.mxu0 0
        %1048 = vmatprep.subr.bf16.mxu0 0
        %1049 = vmatpush2.bf16.msra.mxu0 0
        %1050 = vmatprep.subr.bf16.mxu0 0
        %1051 = vmatpush2.bf16.msra.mxu0 0
        %1052 = vmatprep.subr.bf16.mxu0 0
        %1053 = vmatpush2.bf16.msra.mxu0 0
        %1054 = vmatprep.subr.bf16.mxu0 0
        %1055 = vmatpush2.bf16.msra.mxu0 0
        %1056 = vmatprep.subr.bf16.mxu0 0
        %1057 = vmatpush2.bf16.msra.mxu0 0
        %1058 = vmatprep.mubr.bf16.mxu0 0
        %1059 = vmatmul.mubr.bf16.gmra.mxu0 %v1021
        %v1060 = vpop.f32.mrf.mxu0
        %v1061 = vadd.f32 0.0, %v1060
        %v1062 = vpop.f32.mrf.mxu0
        %v1063 = vpop.f32.mrf.mxu0
        %v1064 = vpop.f32.mrf.mxu0
        %1065 = vdwg.mxu0
        %v1066 = vpack.c.bf16 %v1061, %v1061
        %s1067 = scalar_lea.vmem %s4, 8
        %v1068 = vld [vmem:[%s1067] sm:$0xf]
        %v1070 = vsel %vm635, %v1066, 0
        %v1073 = vsel %vm701, %v1068, 0
        %1075 = vmatprep.subr.bf16.mxu0 0
        %1076 = vmatpush1.bf16.msra.mxu0 0
        %1077 = vmatprep.subr.bf16.mxu0 0
        %1078 = vmatpush1.bf16.msra.mxu0 0
        %1079 = vmatprep.subr.bf16.mxu0 0
        %1080 = vmatpush1.bf16.msra.mxu0 0
        %1081 = vmatprep.subr.bf16.mxu0 0
        %1082 = vmatpush1.bf16.msra.mxu0 0
        %1083 = vmatprep.subr.bf16.mxu0 0
        %1084 = vmatpush1.bf16.msra.mxu0 0
        %1085 = vmatprep.subr.bf16.mxu0 0
        %1086 = vmatpush1.bf16.msra.mxu0 0
        %1087 = vmatprep.subr.bf16.mxu0 0
        %1088 = vmatpush1.bf16.msra.mxu0 0
        %1089 = vmatprep.subr.bf16.mxu0 0
        %1090 = vmatpush1.bf16.msra.mxu0 %v1073
        %1091 = vmatprep.subr.bf16.mxu0 0
        %1092 = vmatpush2.bf16.msra.mxu0 0
        %1093 = vmatprep.subr.bf16.mxu0 0
        %1094 = vmatpush2.bf16.msra.mxu0 0
        %1095 = vmatprep.subr.bf16.mxu0 0
        %1096 = vmatpush2.bf16.msra.mxu0 0
        %1097 = vmatprep.subr.bf16.mxu0 0
        %1098 = vmatpush2.bf16.msra.mxu0 0
        %1099 = vmatprep.subr.bf16.mxu0 0
        %1100 = vmatpush2.bf16.msra.mxu0 0
        %1101 = vmatprep.subr.bf16.mxu0 0
        %1102 = vmatpush2.bf16.msra.mxu0 0
        %1103 = vmatprep.subr.bf16.mxu0 0
        %1104 = vmatpush2.bf16.msra.mxu0 0
        %1105 = vmatprep.subr.bf16.mxu0 0
        %1106 = vmatpush2.bf16.msra.mxu0 0
        %1107 = vmatprep.mubr.bf16.mxu0 0
        %1108 = vmatmul.mubr.bf16.gmra.mxu0 %v1070
        %v1109 = vpop.f32.mrf.mxu0
        %v1110 = vadd.f32 0.0, %v1109
        %v1111 = vpop.f32.mrf.mxu0
        %v1112 = vpop.f32.mrf.mxu0
        %v1113 = vpop.f32.mrf.mxu0
        %1114 = vdwg.mxu0
        %v1115 = vadd.f32 %v949, %v1110
        %1116 = vrot.lane.b32.xlu0 %v624, 104
        %v1117 = vpop.permute.xlu0 %1116
        %1118 = vrot.lane.b32.xlu0 %v624, 72
        %v1119 = vpop.permute.xlu0 %1118
        %v1121 = vsel %vm635, %v1117, 0
        %v1124 = vsel %vm635, %v1119, 0
        %1126 = vmatprep.subr.bf16.mxu0 0
        %1127 = vmatpush1.bf16.xpose.msra.mxu0 0
        %1128 = vmatprep.subr.bf16.mxu0 0
        %1129 = vmatpush1.bf16.xpose.msra.mxu0 0
        %1130 = vmatprep.subr.bf16.mxu0 0
        %1131 = vmatpush1.bf16.xpose.msra.mxu0 0
        %1132 = vmatprep.subr.bf16.mxu0 0
        %1133 = vmatpush1.bf16.xpose.msra.mxu0 0
        %1134 = vmatprep.subr.bf16.mxu0 0
        %1135 = vmatpush1.bf16.xpose.msra.mxu0 0
        %1136 = vmatprep.subr.bf16.mxu0 0
        %1137 = vmatpush1.bf16.xpose.msra.mxu0 0
        %1138 = vmatprep.subr.bf16.mxu0 0
        %1139 = vmatpush1.bf16.xpose.msra.mxu0 0
        %1140 = vmatprep.subr.bf16.mxu0 0
        %1141 = vmatpush1.bf16.xpose.msra.mxu0 %v1124
        %1142 = vmatprep.subr.bf16.mxu0 0
        %1143 = vmatpush2.bf16.xpose.msra.mxu0 0
        %1144 = vmatprep.subr.bf16.mxu0 0
        %1145 = vmatpush2.bf16.xpose.msra.mxu0 0
        %1146 = vmatprep.subr.bf16.mxu0 0
        %1147 = vmatpush2.bf16.xpose.msra.mxu0 0
        %1148 = vmatprep.subr.bf16.mxu0 0
        %1149 = vmatpush2.bf16.xpose.msra.mxu0 0
        %1150 = vmatprep.subr.bf16.mxu0 0
        %1151 = vmatpush2.bf16.xpose.msra.mxu0 0
        %1152 = vmatprep.subr.bf16.mxu0 0
        %1153 = vmatpush2.bf16.xpose.msra.mxu0 0
        %1154 = vmatprep.subr.bf16.mxu0 0
        %1155 = vmatpush2.bf16.xpose.msra.mxu0 0
        %1156 = vmatprep.subr.bf16.mxu0 0
        %1157 = vmatpush2.bf16.xpose.msra.mxu0 0
        %1158 = vmatprep.mubr.bf16.mxu0 0
        %1159 = vmatmul.mubr.bf16.gmra.mxu0 %v1121
        %v1160 = vpop.f32.mrf.mxu0
        %v1161 = vadd.f32 0.0, %v1160
        %v1162 = vpop.f32.mrf.mxu0
        %v1163 = vpop.f32.mrf.mxu0
        %v1164 = vpop.f32.mrf.mxu0
        %1165 = vdwg.mxu0
        %v1166 = vmul.f32 %v1161, 0.35355338
        %v1167 = vadd.f32 %v1166, %v630
        %v1168 = vsel %vm635, %v1167, -inf
        %1169 = vmax.xlane.f32.xlu0 %v1168
        %v1170 = vpop.xlane.xlu0 %1169
        %v1171 = vsub.f32 %v1167, %v1170
        %v1172 = vmul.f32 %v1171, 1.442695
        %v1173 = vpow.pop %v1172
        %v1174 = vsel %vm635, %v1173, 0.0
        %1175 = vadd.xlane.f32.xlu0 %v1174
        %v1176 = vpop.xlane.xlu0 %1175
        %v1177 = vrcp.pop %v1176
        %v1178 = vmul.f32 %v1173, %v1177
        %v1179 = vpack.c.bf16 %v1178, %v1178
        %1180 = vrot.lane.b32.xlu0 %v624, 40
        %v1181 = vpop.permute.xlu0 %1180
        %v1183 = vsel %vm635, %v1179, 0
        %v1186 = vsel %vm701, %v1181, 0
        %1188 = vmatprep.subr.bf16.mxu0 0
        %1189 = vmatpush1.bf16.msra.mxu0 0
        %1190 = vmatprep.subr.bf16.mxu0 0
        %1191 = vmatpush1.bf16.msra.mxu0 0
        %1192 = vmatprep.subr.bf16.mxu0 0
        %1193 = vmatpush1.bf16.msra.mxu0 0
        %1194 = vmatprep.subr.bf16.mxu0 0
        %1195 = vmatpush1.bf16.msra.mxu0 0
        %1196 = vmatprep.subr.bf16.mxu0 0
        %1197 = vmatpush1.bf16.msra.mxu0 0
        %1198 = vmatprep.subr.bf16.mxu0 0
        %1199 = vmatpush1.bf16.msra.mxu0 0
        %1200 = vmatprep.subr.bf16.mxu0 0
        %1201 = vmatpush1.bf16.msra.mxu0 0
        %1202 = vmatprep.subr.bf16.mxu0 0
        %1203 = vmatpush1.bf16.msra.mxu0 %v1186
        %1204 = vmatprep.subr.bf16.mxu0 0
        %1205 = vmatpush2.bf16.msra.mxu0 0
        %1206 = vmatprep.subr.bf16.mxu0 0
        %1207 = vmatpush2.bf16.msra.mxu0 0
        %1208 = vmatprep.subr.bf16.mxu0 0
        %1209 = vmatpush2.bf16.msra.mxu0 0
        %1210 = vmatprep.subr.bf16.mxu0 0
        %1211 = vmatpush2.bf16.msra.mxu0 0
        %1212 = vmatprep.subr.bf16.mxu0 0
        %1213 = vmatpush2.bf16.msra.mxu0 0
        %1214 = vmatprep.subr.bf16.mxu0 0
        %1215 = vmatpush2.bf16.msra.mxu0 0
        %1216 = vmatprep.subr.bf16.mxu0 0
        %1217 = vmatpush2.bf16.msra.mxu0 0
        %1218 = vmatprep.subr.bf16.mxu0 0
        %1219 = vmatpush2.bf16.msra.mxu0 0
        %1220 = vmatprep.mubr.bf16.mxu0 0
        %1221 = vmatmul.mubr.bf16.gmra.mxu0 %v1183
        %v1222 = vpop.f32.mrf.mxu0
        %v1223 = vadd.f32 0.0, %v1222
        %v1224 = vpop.f32.mrf.mxu0
        %v1225 = vpop.f32.mrf.mxu0
        %v1226 = vpop.f32.mrf.mxu0
        %1227 = vdwg.mxu0
        %v1228 = vpack.c.bf16 %v1223, %v1223
        %s1229 = scalar_lea.vmem %s4, 12
        %v1230 = vld [vmem:[%s1229] sm:$0xf]
        %v1232 = vsel %vm635, %v1228, 0
        %v1235 = vsel %vm701, %v1230, 0
        %1237 = vmatprep.subr.bf16.mxu0 0
        %1238 = vmatpush1.bf16.msra.mxu0 0
        %1239 = vmatprep.subr.bf16.mxu0 0
        %1240 = vmatpush1.bf16.msra.mxu0 0
        %1241 = vmatprep.subr.bf16.mxu0 0
        %1242 = vmatpush1.bf16.msra.mxu0 0
        %1243 = vmatprep.subr.bf16.mxu0 0
        %1244 = vmatpush1.bf16.msra.mxu0 0
        %1245 = vmatprep.subr.bf16.mxu0 0
        %1246 = vmatpush1.bf16.msra.mxu0 0
        %1247 = vmatprep.subr.bf16.mxu0 0
        %1248 = vmatpush1.bf16.msra.mxu0 0
        %1249 = vmatprep.subr.bf16.mxu0 0
        %1250 = vmatpush1.bf16.msra.mxu0 0
        %1251 = vmatprep.subr.bf16.mxu0 0
        %1252 = vmatpush1.bf16.msra.mxu0 %v1235
        %1253 = vmatprep.subr.bf16.mxu0 0
        %1254 = vmatpush2.bf16.msra.mxu0 0
        %1255 = vmatprep.subr.bf16.mxu0 0
        %1256 = vmatpush2.bf16.msra.mxu0 0
        %1257 = vmatprep.subr.bf16.mxu0 0
        %1258 = vmatpush2.bf16.msra.mxu0 0
        %1259 = vmatprep.subr.bf16.mxu0 0
        %1260 = vmatpush2.bf16.msra.mxu0 0
        %1261 = vmatprep.subr.bf16.mxu0 0
        %1262 = vmatpush2.bf16.msra.mxu0 0
        %1263 = vmatprep.subr.bf16.mxu0 0
        %1264 = vmatpush2.bf16.msra.mxu0 0
        %1265 = vmatprep.subr.bf16.mxu0 0
        %1266 = vmatpush2.bf16.msra.mxu0 0
        %1267 = vmatprep.subr.bf16.mxu0 0
        %1268 = vmatpush2.bf16.msra.mxu0 0
        %1269 = vmatprep.mubr.bf16.mxu0 0
        %1270 = vmatmul.mubr.bf16.gmra.mxu0 %v1232
        %v1271 = vpop.f32.mrf.mxu0
        %v1272 = vadd.f32 0.0, %v1271
        %v1273 = vpop.f32.mrf.mxu0
        %v1274 = vpop.f32.mrf.mxu0
        %v1275 = vpop.f32.mrf.mxu0
        %1276 = vdwg.mxu0
        %v1277 = vadd.f32 %v1115, %v1272
        %v1278 = vadd.f32 %v556, %v1277
        %v1279 = vld [vmem:[%s5] sm:$0x1]
        %v1281 = vlaneseq
        %v1282 = vshrl.u32 %v1281, 7
        %v1283 = vsub.s32 0, %v1282
        %v1284 = vrot.slane %v1279, %v1283
        %v1286 = vadd.f32 %v1278, %v1284
        %v1287 = vld [vmem:[#allocation7] sm:$0x1]
        %v1288 = vld [vmem:[#allocation8] sm:$0x1]
        %v1289 = vsel %vm580, %v1286, 0.0
        %1290 = vadd.xlane.f32.xlu0 %v1289
        %v1291 = vpop.xlane.xlu0 %1290
        %v1292 = vrcp.pop 32.0
        %v1293 = vmul.f32 %v1291, %v1292
        %v1294 = vsub.f32 %v1286, %v1293
        %v1295 = vmul.f32 %v1294, %v1294
        %v1296 = vsel %vm580, %v1295, 0.0
        %1297 = vadd.xlane.f32.xlu0 %v1296
        %v1298 = vpop.xlane.xlu0 %1297
        %v1299 = vmul.f32 %v1298, %v1292
        %v1300 = vadd.f32 %v1299, 1e-05
        %v1301 = vrsqrt.pop %v1300
        %v1302 = vmul.f32 %v1294, %v1301
        %v1304 = vlaneseq
        %v1305 = vshrl.u32 %v1304, 7
        %v1306 = vsub.s32 0, %v1305
        %v1307 = vrot.slane %v1287, %v1306
        %v1309 = vmul.f32 %v1302, %v1307
        %v1311 = vlaneseq
        %v1312 = vshrl.u32 %v1311, 7
        %v1313 = vsub.s32 0, %v1312
        %v1314 = vrot.slane %v1288, %v1313
        %v1316 = vadd.f32 %v1309, %v1314
        %v1317 = vpack.c.bf16 %v1316, %v1316
        %v1318 = vld [vmem:[%s8] sm:$0xf]
        %v1319 = vld [vmem:[%s8 + $0x4] sm:$0xf]
        %v1320 = vld [vmem:[%s8 + $0x8] sm:$0xf]
        %v1321 = vld [vmem:[%s8 + $0xc] sm:$0xf]
        %v1322 = vld [vmem:[#allocation10] sm:$0x1]
        %v1324 = vlaneseq
        %v1325 = vshrl.u32 %v1324, 7
        %v1326 = vsub.s32 0, %v1325
        %v1327 = vrot.slane %v1322, %v1326
        %v1333 = vunpack.c.l.b16 %v1318
        %v1334 = vunpack.c.l.b16 %v1319
        %v1335 = vunpack.c.l.b16 %v1320
        %v1336 = vunpack.c.l.b16 %v1321
        %v1337 = vpack.c.b16 %v1334, %v1333
        %v1338 = vpack.c.b16 %v1336, %v1335
        %v1342 = vsel %vm580, %v1317, 0
        %1344 = vmatprep.subr.bf16.mxu0 0
        %1345 = vmatpush1.bf16.msra.mxu0 0
        %1346 = vmatprep.subr.bf16.mxu0 0
        %1347 = vmatpush1.bf16.msra.mxu0 0
        %1348 = vmatprep.subr.bf16.mxu0 0
        %1349 = vmatpush1.bf16.msra.mxu0 0
        %1350 = vmatprep.subr.bf16.mxu0 0
        %1351 = vmatpush1.bf16.msra.mxu0 0
        %1352 = vmatprep.subr.bf16.mxu0 0
        %1353 = vmatpush1.bf16.msra.mxu0 0
        %1354 = vmatprep.subr.bf16.mxu0 0
        %1355 = vmatpush1.bf16.msra.mxu0 0
        %1356 = vmatprep.subr.bf16.mxu0 0
        %1357 = vmatpush1.bf16.msra.mxu0 %v1338
        %1358 = vmatprep.subr.bf16.mxu0 0
        %1359 = vmatpush1.bf16.msra.mxu0 %v1337
        %1360 = vmatprep.subr.bf16.mxu0 0
        %1361 = vmatpush2.bf16.msra.mxu0 0
        %1362 = vmatprep.subr.bf16.mxu0 0
        %1363 = vmatpush2.bf16.msra.mxu0 0
        %1364 = vmatprep.subr.bf16.mxu0 0
        %1365 = vmatpush2.bf16.msra.mxu0 0
        %1366 = vmatprep.subr.bf16.mxu0 0
        %1367 = vmatpush2.bf16.msra.mxu0 0
        %1368 = vmatprep.subr.bf16.mxu0 0
        %1369 = vmatpush2.bf16.msra.mxu0 0
        %1370 = vmatprep.subr.bf16.mxu0 0
        %1371 = vmatpush2.bf16.msra.mxu0 0
        %1372 = vmatprep.subr.bf16.mxu0 0
        %1373 = vmatpush2.bf16.msra.mxu0 0
        %1374 = vmatprep.subr.bf16.mxu0 0
        %1375 = vmatpush2.bf16.msra.mxu0 0
        %1376 = vmatprep.mubr.bf16.mxu0 0
        %1377 = vmatmul.mubr.bf16.gmra.mxu0 %v1342
        %v1378 = vpop.f32.mrf.mxu0
        %v1379 = vadd.f32 %v1327, %v1378
        %v1380 = vpop.f32.mrf.mxu0
        %v1381 = vpop.f32.mrf.mxu0
        %v1382 = vpop.f32.mrf.mxu0
        %1383 = vdwg.mxu0
        %v1384 = vmul.f32 %v1379, 0.5
        %v1385 = vmul.f32 %v1379, 0.044715
        %v1386 = vmul.f32 %v1385, %v1379
        %v1387 = vmul.f32 %v1386, %v1379
        %v1388 = vadd.f32 %v1379, %v1387
        %v1389 = vmul.f32 %v1388, 0.7978846
        %v1390 = vtanh.pop %v1389
        %v1391 = vadd.f32 %v1390, 1.0
        %v1392 = vmul.f32 %v1384, %v1391
        %v1393 = vpack.c.bf16 %v1392, %v1392
        %v1394 = vld [vmem:[%s10] sm:$0xf]
        %v1395 = vld [vmem:[%s10 + $0x4] sm:$0xf]
        %v1396 = vld [vmem:[%s10 + $0x8] sm:$0xf]
        %v1397 = vld [vmem:[%s10 + $0xc] sm:$0xf]
        %v1398 = vld [vmem:[%s10 + $0x10] sm:$0xf]
        %v1399 = vld [vmem:[%s10 + $0x14] sm:$0xf]
        %v1400 = vld [vmem:[%s10 + $0x18] sm:$0xf]
        %v1401 = vld [vmem:[%s10 + $0x1c] sm:$0xf]
        %v1410 = vunpack.c.l.b16 %v1394
        %v1411 = vunpack.c.l.b16 %v1395
        %v1412 = vunpack.c.l.b16 %v1396
        %v1413 = vunpack.c.l.b16 %v1397
        %v1414 = vunpack.c.l.b16 %v1398
        %v1415 = vunpack.c.l.b16 %v1399
        %v1416 = vunpack.c.l.b16 %v1400
        %v1417 = vunpack.c.l.b16 %v1401
        %v1418 = vpack.c.b16 %v1411, %v1410
        %v1419 = vpack.c.b16 %v1413, %v1412
        %v1420 = vpack.c.b16 %v1415, %v1414
        %v1421 = vpack.c.b16 %v1417, %v1416
        %vm1426 = vcmask 523264
        %v1428 = vsel %vm1426, %v1393, 0
        %1430 = vmatprep.subr.bf16.mxu0 0
        %1431 = vmatpush1.bf16.msra.mxu0 0
        %1432 = vmatprep.subr.bf16.mxu0 0
        %1433 = vmatpush1.bf16.msra.mxu0 0
        %1434 = vmatprep.subr.bf16.mxu0 0
        %1435 = vmatpush1.bf16.msra.mxu0 0
        %1436 = vmatprep.subr.bf16.mxu0 0
        %1437 = vmatpush1.bf16.msra.mxu0 0
        %1438 = vmatprep.subr.bf16.mxu0 0
        %1439 = vmatpush1.bf16.msra.mxu0 %v1421
        %1440 = vmatprep.subr.bf16.mxu0 0
        %1441 = vmatpush1.bf16.msra.mxu0 %v1420
        %1442 = vmatprep.subr.bf16.mxu0 0
        %1443 = vmatpush1.bf16.msra.mxu0 %v1419
        %1444 = vmatprep.subr.bf16.mxu0 0
        %1445 = vmatpush1.bf16.msra.mxu0 %v1418
        %1446 = vmatprep.subr.bf16.mxu0 0
        %1447 = vmatpush2.bf16.msra.mxu0 0
        %1448 = vmatprep.subr.bf16.mxu0 0
        %1449 = vmatpush2.bf16.msra.mxu0 0
        %1450 = vmatprep.subr.bf16.mxu0 0
        %1451 = vmatpush2.bf16.msra.mxu0 0
        %1452 = vmatprep.subr.bf16.mxu0 0
        %1453 = vmatpush2.bf16.msra.mxu0 0
        %1454 = vmatprep.subr.bf16.mxu0 0
        %1455 = vmatpush2.bf16.msra.mxu0 0
        %1456 = vmatprep.subr.bf16.mxu0 0
        %1457 = vmatpush2.bf16.msra.mxu0 0
        %1458 = vmatprep.subr.bf16.mxu0 0
        %1459 = vmatpush2.bf16.msra.mxu0 0
        %1460 = vmatprep.subr.bf16.mxu0 0
        %1461 = vmatpush2.bf16.msra.mxu0 0
        %1462 = vmatprep.mubr.bf16.mxu0 0
        %1463 = vmatmul.mubr.bf16.gmra.mxu0 %v1428
        %v1464 = vpop.f32.mrf.mxu0
        %v1465 = vadd.f32 0.0, %v1464
        %v1466 = vpop.f32.mrf.mxu0
        %v1467 = vpop.f32.mrf.mxu0
        %v1468 = vpop.f32.mrf.mxu0
        %1469 = vdwg.mxu0
        %v1470 = vadd.f32 %v1316, %v1465
        %v1471 = vld [vmem:[%s11] sm:$0x1]
        %v1473 = vlaneseq
        %v1474 = vshrl.u32 %v1473, 7
        %v1475 = vsub.s32 0, %v1474
        %v1476 = vrot.slane %v1471, %v1475
        %v1478 = vadd.f32 %v1470, %v1476
        %v1479 = vld [vmem:[%s12] sm:$0x1]
        %v1480 = vld [vmem:[%s13] sm:$0x1]
        %v1481 = vsel %vm580, %v1478, 0.0
        %1482 = vadd.xlane.f32.xlu0 %v1481
        %v1483 = vpop.xlane.xlu0 %1482
        %v1484 = vmul.f32 %v1483, %v1292
        %v1485 = vsub.f32 %v1478, %v1484
        %v1486 = vmul.f32 %v1485, %v1485
        %v1487 = vsel %vm580, %v1486, 0.0
        %1488 = vadd.xlane.f32.xlu0 %v1487
        %v1489 = vpop.xlane.xlu0 %1488
        %v1490 = vmul.f32 %v1489, %v1292
        %v1491 = vadd.f32 %v1490, 1e-05
        %v1492 = vrsqrt.pop %v1491
        %v1493 = vmul.f32 %v1485, %v1492
        %v1495 = vlaneseq
        %v1496 = vshrl.u32 %v1495, 7
        %v1497 = vsub.s32 0, %v1496
        %v1498 = vrot.slane %v1479, %v1497
        %v1500 = vmul.f32 %v1493, %v1498
        %v1502 = vlaneseq
        %v1503 = vshrl.u32 %v1502, 7
        %v1504 = vsub.s32 0, %v1503
        %v1505 = vrot.slane %v1480, %v1504
        %v1507 = vadd.f32 %v1500, %v1505
        %v1508 = vpack.c.bf16 %v1507, %v1507
        %vm1509 = vcmask 257024
        %1510 = vst.msk [vmem:[%s553] sm:$0xf] %vm1509, %v1508
        %s1511 = sand.u32 %s347, 1
        %s1512 = scalar_lea.sflag [#allocation4], %s1511
        %s1513 = sand.u32 %s347, 1
        %s1514 = smul.addr %s1513, 4
        %s1515 = scalar_lea.vmem [#allocation11], %s1514
        // Predicated region
        $region97: #{tpu_custom_call.1} parent=75 // pred_check
          %p1516 = pneg %p357
        $region98: #{tpu_custom_call.1} parent=75 // pred_check_branch
          %1518 = sbr.rel (%p1516) target = $region100
        $region99: #{tpu_custom_call.1} parent=75 // pred_region
          %s1520 = ssub.s32 64, 64
          %1521 = vsyncadd %s1512, %s1520
          %s1522 = smul.addr %s35, 64
          %s1523 = scalar_lea.hbm %s14, %s1522
          %s1525 = sshll.u32 %s1515, 4
          %s1526 = int_to_ptr.vmem [resolvable:$true] %s1525
          %1528 = dma.vmem_to_hbm [thread:$0]  %s1526, 64, %s1523, %s1512
        $region100: #{tpu_custom_call.1} parent=75 // pred_fallthru
          _
      $region76: #{tpu_custom_call.1} parent=5 // pred_fallthru
        _
      %p1529 = scmp.le.s32.totalorder 2, %s30
      // Predicated region
      $region101: #{tpu_custom_call.1} parent=5 // pred_check
        %p1530 = pneg %p1529
      $region102: #{tpu_custom_call.1} parent=5 // pred_check_branch
        %1532 = sbr.rel (%p1530) target = $region104
      $region103: #{tpu_custom_call.1} parent=5 // pred_region
        %s1533 = ssub.s32 %s30, 2
        // Predicated region
        $region105: #{tpu_custom_call.1} parent=103 // pred_check
          %p1534 = pneg %p363
        $region106: #{tpu_custom_call.1} parent=103 // pred_check_branch
          %1536 = sbr.rel (%p1534) target = $region108
        $region107: #{tpu_custom_call.1} parent=103 // pred_region
          %s1537 = sand.u32 %s348, 1
          %s1538 = scalar_lea.sflag [#allocation4], %s1537
          %s1539 = sand.u32 %s348, 1
          %s1540 = smul.addr %s1539, 4
          %s1541 = scalar_lea.vmem [#allocation11], %s1540
          %1542 = dma.done %s1538, 64
        $region108: #{tpu_custom_call.1} parent=103 // pred_fallthru
          _
      $region104: #{tpu_custom_call.1} parent=5 // pred_fallthru
        _
    $region6: #{tpu_custom_call.1} parent=1 // loop_footer
      %s34 = sadd.s32 1, %s30
    $region7: #{tpu_custom_call.1} parent=1 // loop_footer_branch
      %29 = sbr.rel target = $region3
    $region8: #{tpu_custom_call.1} parent=1 // loop_exit
      _
    %1543 = vsyncpa [#allocation3], 1
    %s1544 = scalar_lea.sflag [#allocation3], 1
    %1545 = vsyncpa %s1544, 1
    %1546 = vsyncpa [#allocation6], 1
    %s1547 = scalar_lea.sflag [#allocation6], 1
    %1548 = vsyncpa %s1547, 1
    %1549 = vsyncpa [#allocation9], 1
    %1550 = vsyncpa [#allocation4], 1
    %s1551 = scalar_lea.sflag [#allocation4], 1
    %1552 = vsyncpa %s1551, 1

</llo_original>
